<compile_context>
chip_gen: v6e
topology: v6e:2x2x1
jax: 0.10.0
libtpu: 0.0.40
codegen_flags: <defaults>
</compile_context>

<pallas_src>
import numpy as np

import jax
import jax.numpy as jnp
from jax.experimental import pallas as pl
from jax.experimental.pallas import tpu as pltpu


BLOCK_B = 8   # images per grid step (keep a multiple of 8 for clean sublanes)


# ----------------------------- fused Pallas kernel -----------------------------

def _lenet_kernel(x_ref, a1_ref, b1_ref, a2_ref, b2_ref, s2_ref, t2_ref,
                  wf1_ref, bf1_ref, wo_ref, bo_ref, o_ref):
    dot = lambda a, b: jnp.dot(a, b, preferred_element_type=jnp.float32)

    m = x_ref.shape[1]          # B*13 rows (b-major, 13 pool1 rows per image)
    bimg = m // 13              # images in this grid step

    # conv1 (3x3, 1->6): dy folded into K by the wrapper im2row; one dot per
    # pool1 row phase.  ReLU+bias applied after the row-phase max (exact).
    acc0 = dot(x_ref[0], a1_ref[...])                       # (m, 256)
    acc1 = dot(x_ref[1], a1_ref[...])                       # (m, 256)
    u = jnp.maximum(jnp.maximum(acc0, acc1) + b1_ref[...], 0.0)

    # pool1 column phase: even-w conv columns live in lanes [0,128), odd-w in
    # [128,256) -> 128-aligned lane split + VPU max (no selector dots).
    act2 = jnp.maximum(u[:, :128], u[:, 128:])              # rows b*13+j, cols w*6+c

    # conv2 (5x5, 6->10): shifted-row accumulation across the whole batch block.
    # Rows with h_out > 8 inside each image are garbage but never read later.
    act2p = jnp.concatenate(
        [act2, jnp.zeros((8, 128), jnp.float32)], axis=0)   # (m+8, 128)
    acc2 = dot(act2p[0:m, :], a2_ref[0])
    for dy in range(1, 5):
        acc2 = acc2 + dot(act2p[dy:dy + m, :], a2_ref[dy])
    act3 = jnp.maximum(acc2 + b2_ref[...], 0.0)             # rows b*13+h, cols w*10+c

    # pool2: row-phase max first via the S2 selectors (which also compact the
    # stride-13 rows into a dense h-major (4*B, .) layout), then column-phase
    # max via the two T2 selectors.
    v = jnp.maximum(dot(s2_ref[0], act3), dot(s2_ref[1], act3))   # (4*B, 128)
    act4 = jnp.maximum(dot(v, t2_ref[0]), dot(v, t2_ref[1]))      # (4*B, 128)

    # fc1: gather each image's 4 pooled rows into lanes -> single (B,512) dot.
    act4_cat = jnp.concatenate(
        [act4[h * bimg:(h + 1) * bimg, :] for h in range(4)], axis=1)  # (B, 512)
    h1 = jnp.maximum(dot(act4_cat, wf1_ref[...]) + bf1_ref[...], 0.0)  # (B, 128)

    # output layer: one sublane-dense (B,128) store.
    o_ref[...] = dot(h1, wo_ref[...]) + bo_ref[...]


def network_forward(packed, x_nchw):
    """Fused forward.  x_nchw: (N, 1, 28, 28) f32 -> (N, 10) logits."""
    n = x_nchw.shape[0]
    bb = BLOCK_B
    n_pad = ((n + bb - 1) // bb) * bb
    x3 = x_nchw.reshape(n, 28, 28).astype(jnp.float32)
    if n_pad != n:
        x3 = jnp.pad(x3, ((0, n_pad - n), (0, 0), (0, 0)))

    # Wrapper-side im2row per pool1 row phase: row (b, j) of phase p holds the
    # 84 pixels (3 input rows of 28) feeding conv1 output row 2*j + p.
    phases = []
    for p in range(2):
        parts = [x3[:, p + dy: p + dy + 26: 2, :] for dy in range(3)]  # (n_pad,13,28)
        phases.append(jnp.concatenate(parts, axis=-1))                 # (n_pad,13,84)
    win = jnp.stack(phases, axis=0)                                    # (2,n_pad,13,84)
    win = jnp.pad(win, ((0, 0), (0, 0), (0, 0), (0, 44)))              # lane-pad -> 128
    win = win.reshape(2, n_pad * 13, 128)

    out = pl.pallas_call(
        _lenet_kernel,
        out_shape=jax.ShapeDtypeStruct((n_pad, 128), jnp.float32),
        grid=(n_pad // bb,),
        in_specs=[
            pl.BlockSpec((2, bb * 13, 128), lambda i: (0, i, 0)),      # im2row input
            pl.BlockSpec((128, 256), lambda i: (0, 0)),                # A1 (conv1)
            pl.BlockSpec((1, 256), lambda i: (0, 0)),                  # b1 row
            pl.BlockSpec((5, 128, 128), lambda i: (0, 0, 0)),          # A2 (conv2)
            pl.BlockSpec((1, 128), lambda i: (0, 0)),                  # b2 row
            pl.BlockSpec((2, 4 * bb, 13 * bb), lambda i: (0, 0, 0)),   # S2 (pool2 rows)
            pl.BlockSpec((2, 128, 128), lambda i: (0, 0, 0)),          # T2 (pool2 cols)
            pl.BlockSpec((512, 128), lambda i: (0, 0)),                # fc1 (merged)
            pl.BlockSpec((1, 128), lambda i: (0, 0)),                  # fc1 bias
            pl.BlockSpec((128, 128), lambda i: (0, 0)),                # out weight
            pl.BlockSpec((1, 128), lambda i: (0, 0)),                  # out bias
        ],
        out_specs=pl.BlockSpec((bb, 128), lambda i: (i, 0)),
        compiler_params=pltpu.CompilerParams(
            dimension_semantics=("parallel",)),
    )(win, packed["A1"], packed["b1"], packed["A2"], packed["b2"],
      packed["S2"], packed["T2"], packed["Wf1"], packed["bf1"],
      packed["Wout"], packed["bout"])

    return out[:n, :10]


# ------------------------- parameter packing (one-time) -------------------------

def pack_params(params, block_b=BLOCK_B):
    """Lower convs/pools/fcs into the padded, lane-dense matrices the kernel uses."""
    w1 = np.asarray(params["conv1_w"], np.float32)   # (6, 1, 3, 3)
    b1 = np.asarray(params["conv1_b"], np.float32)   # (6,)
    w2 = np.asarray(params["conv2_w"], np.float32)   # (10, 6, 5, 5)
    b2 = np.asarray(params["conv2_b"], np.float32)   # (10,)
    wf = np.asarray(params["fc1_w"], np.float32)     # (90, 160)
    bf = np.asarray(params["fc1_b"], np.float32)     # (90,)
    wo = np.asarray(params["out_w"], np.float32)     # (10, 90)
    bo = np.asarray(params["out_b"], np.float32)     # (10,)

    # conv1 lowered to one (K=128, N=256) matrix.  K index = dy*28 + x_col
    # (84 valid).  Output cols: conv col w=2w'   -> lane       w'*6 + c
    #                           conv col w=2w'+1 -> lane 128 + w'*6 + c
    A1 = np.zeros((128, 256), np.float32)
    for w in range(26):
        base = (w // 2) * 6 + (128 if (w % 2) else 0)
        for dy in range(3):
            for dx in range(3):
                A1[dy * 28 + w + dx, base:base + 6] = w1[:, 0, dy, dx]
    b1row = np.zeros((1, 256), np.float32)
    b1row[0, 0:78] = np.tile(b1, 13)
    b1row[0, 128:206] = np.tile(b1, 13)

    # conv2: per-dy lowered ((w_in,c_in) x (w_out,c_out)) matrices.
    A2 = np.zeros((5, 128, 128), np.float32)
    for dy in range(5):
        for w in range(9):
            for dx in range(5):
                j = w + dx
                for ci in range(6):
                    A2[dy, j * 6 + ci, w * 10:w * 10 + 10] = w2[:, ci, dy, dx]
    b2row = np.zeros((1, 128), np.float32)
    b2row[0, :90] = np.tile(b2, 9)

    # pool2 row-phase selectors; they also compact the stride-13 rows (4 garbage
    # conv2 rows per image) into a dense h-major (4*B, .) layout.
    S2 = np.zeros((2, 4 * block_b, 13 * block_b), np.float32)
    for p in range(2):
        for j in range(4):
            for b in range(block_b):
                S2[p, j * block_b + b, b * 13 + 2 * j + p] = 1.0

    # pool2 column-phase selectors (floor mode: conv2 col 8 dropped).
    T2 = np.zeros((2, 128, 128), np.float32)
    for p in range(2):
        for wq in range(4):
            for c in range(10):
                T2[p, (2 * wq + p) * 10 + c, wq * 10 + c] = 1.0

    # fc1 merged into one (512, 128): rows = h*128 + w*10 + c, consuming the
    # kernel's lane-concatenated pooled layout (torch flatten idx = c*16+h*4+w).
    Wf1 = np.zeros((512, 128), np.float32)
    for h in range(4):
        for w in range(4):
            for co in range(10):
                Wf1[h * 128 + w * 10 + co, :90] = wf[:, co * 16 + h * 4 + w]
    bf1row = np.zeros((1, 128), np.float32)
    bf1row[0, :90] = bf

    Wout = np.zeros((128, 128), np.float32)
    Wout[:90, :10] = wo.T
    borow = np.zeros((1, 128), np.float32)
    borow[0, :10] = bo

    mats = dict(A1=A1, b1=b1row, A2=A2, b2=b2row, S2=S2, T2=T2,
                Wf1=Wf1, bf1=bf1row, Wout=Wout, bout=borow)
    return {k: jnp.asarray(v) for k, v in mats.items()}


# ------------------------------- params & reference -------------------------------

def init_params(key):
    k = jax.random.split(key, 8)
    s = 0.1
    return {
        "conv1_w": s * jax.random.normal(k[0], (6, 1, 3, 3), jnp.float32),
        "conv1_b": s * jax.random.normal(k[1], (6,), jnp.float32),
        "conv2_w": s * jax.random.normal(k[2], (10, 6, 5, 5), jnp.float32),
        "conv2_b": s * jax.random.normal(k[3], (10,), jnp.float32),
        "fc1_w":   s * jax.random.normal(k[4], (90, 160), jnp.float32),
        "fc1_b":   s * jax.random.normal(k[5], (90,), jnp.float32),
        "out_w":   s * jax.random.normal(k[6], (10, 90), jnp.float32),
        "out_b":   s * jax.random.normal(k[7], (10,), jnp.float32),
    }


def reference_forward(params, x):
    """Pure-JAX (XLA) reference mirroring the PyTorch forward (NCHW)."""
    dn = ("NCHW", "OIHW", "NCHW")
    hp = jax.lax.Precision.HIGHEST
    t = jax.lax.conv_general_dilated(x, params["conv1_w"], (1, 1), "VALID",
                                     dimension_numbers=dn, precision=hp)
    t = jax.nn.relu(t + params["conv1_b"].reshape(1, -1, 1, 1))
    t = jax.lax.reduce_window(t, -jnp.inf, jax.lax.max,
                              (1, 1, 2, 2), (1, 1, 2, 2), "VALID")
    t = jax.lax.conv_general_dilated(t, params["conv2_w"], (1, 1), "VALID",
                                     dimension_numbers=dn, precision=hp)
    t = jax.nn.relu(t + params["conv2_b"].reshape(1, -1, 1, 1))
    t = jax.lax.reduce_window(t, -jnp.inf, jax.lax.max,
                              (1, 1, 2, 2), (1, 1, 2, 2), "VALID")
    t = t.reshape(-1, 160)
    t = jax.nn.relu(jnp.dot(t, params["fc1_w"].T, precision=hp) + params["fc1_b"])
    t = jnp.dot(t, params["out_w"].T, precision=hp) + params["out_b"]
    return t


if __name__ == "__main__":
    key = jax.random.PRNGKey(0)
    kp, kx = jax.random.split(key)
    params = init_params(kp)
    packed = pack_params(params)

    # Input shape implied by the module: (N, 1, 28, 28).
    x = jax.random.normal(kx, (2, 1, 28, 28), jnp.float32)

    forward = jax.jit(network_forward)
    out = jax.block_until_ready(forward(packed, x))
    ref = jax.block_until_ready(reference_forward(params, x))

    assert out.shape == (2, 10), out.shape
    err = float(jnp.max(jnp.abs(out - ref)))
    assert jnp.allclose(out, ref, atol=2e-3, rtol=2e-3), (
        f"Pallas output mismatch vs JAX reference (max abs err {err})")
    print("KERNEL_OK")
</pallas_src>

<mosaic_0001>
module attributes {stable_mosaic.version = 11 : i64} {
  func.func @_lenet_kernel(%arg0: i32, %arg1: memref<2x104x128xf32, #tpu.memory_space<vmem>>, %arg2: memref<128x256xf32, #tpu.memory_space<vmem>>, %arg3: memref<1x256xf32, #tpu.memory_space<vmem>>, %arg4: memref<5x128x128xf32, #tpu.memory_space<vmem>>, %arg5: memref<1x128xf32, #tpu.memory_space<vmem>>, %arg6: memref<2x32x104xf32, #tpu.memory_space<vmem>>, %arg7: memref<2x128x128xf32, #tpu.memory_space<vmem>>, %arg8: memref<512x128xf32, #tpu.memory_space<vmem>>, %arg9: memref<1x128xf32, #tpu.memory_space<vmem>>, %arg10: memref<128x128xf32, #tpu.memory_space<vmem>>, %arg11: memref<1x128xf32, #tpu.memory_space<vmem>>, %arg12: memref<8x128xf32, #tpu.memory_space<vmem>>) attributes {dimension_semantics = [#tpu.dimension_semantics<parallel>], iteration_bounds = array<i64: 1>, scalar_prefetch = 0 : i64, scratch_operands = 0 : i64, tpu.core_type = #tpu.core_type<tc>, window_params = [{transform_indices = @transform_0, window_bounds = array<i64: 2, 104, 128>}, {pipeline_mode = #tpu.pipeline_mode<synchronous>, transform_indices = @transform_1, window_bounds = array<i64: 128, 256>}, {pipeline_mode = #tpu.pipeline_mode<synchronous>, transform_indices = @transform_2, window_bounds = array<i64: 1, 256>}, {pipeline_mode = #tpu.pipeline_mode<synchronous>, transform_indices = @transform_3, window_bounds = array<i64: 5, 128, 128>}, {pipeline_mode = #tpu.pipeline_mode<synchronous>, transform_indices = @transform_4, window_bounds = array<i64: 1, 128>}, {pipeline_mode = #tpu.pipeline_mode<synchronous>, transform_indices = @transform_5, window_bounds = array<i64: 2, 32, 104>}, {pipeline_mode = #tpu.pipeline_mode<synchronous>, transform_indices = @transform_6, window_bounds = array<i64: 2, 128, 128>}, {pipeline_mode = #tpu.pipeline_mode<synchronous>, transform_indices = @transform_7, window_bounds = array<i64: 512, 128>}, {pipeline_mode = #tpu.pipeline_mode<synchronous>, transform_indices = @transform_8, window_bounds = array<i64: 1, 128>}, {pipeline_mode = #tpu.pipeline_mode<synchronous>, transform_indices = @transform_9, window_bounds = array<i64: 128, 128>}, {pipeline_mode = #tpu.pipeline_mode<synchronous>, transform_indices = @transform_10, window_bounds = array<i64: 1, 128>}, {transform_indices = @transform_11, window_bounds = array<i64: 8, 128>}]} {
    %c0 = arith.constant 0 : index
    %c0_0 = arith.constant 0 : index
    %c0_1 = arith.constant 0 : index
    %0 = vector.load %arg1[%c0, %c0_0, %c0_1] : memref<2x104x128xf32, #tpu.memory_space<vmem>>, vector<1x104x128xf32>
    %1 = vector.shape_cast %0 : vector<1x104x128xf32> to vector<104x128xf32>
    %c0_2 = arith.constant 0 : index
    %c0_3 = arith.constant 0 : index
    %2 = vector.load %arg2[%c0_2, %c0_3] : memref<128x256xf32, #tpu.memory_space<vmem>>, vector<128x256xf32>
    %cst = arith.constant dense<0.000000e+00> : vector<104x256xf32>
    %3 = tpu.matmul %1, %2, %cst {dimension_numbers = #tpu.dot_dimension_numbers<[1], [0], [0], [1], [0, 0, 1, 1], [], []>} : vector<104x128xf32>, vector<128x256xf32>, vector<104x256xf32> -> vector<104x256xf32>
    %c1 = arith.constant 1 : index
    %c0_4 = arith.constant 0 : index
    %c0_5 = arith.constant 0 : index
    %4 = vector.load %arg1[%c1, %c0_4, %c0_5] : memref<2x104x128xf32, #tpu.memory_space<vmem>>, vector<1x104x128xf32>
    %5 = vector.shape_cast %4 : vector<1x104x128xf32> to vector<104x128xf32>
    %c0_6 = arith.constant 0 : index
    %c0_7 = arith.constant 0 : index
    %6 = vector.load %arg2[%c0_6, %c0_7] : memref<128x256xf32, #tpu.memory_space<vmem>>, vector<128x256xf32>
    %cst_8 = arith.constant dense<0.000000e+00> : vector<104x256xf32>
    %7 = tpu.matmul %5, %6, %cst_8 {dimension_numbers = #tpu.dot_dimension_numbers<[1], [0], [0], [1], [0, 0, 1, 1], [], []>} : vector<104x128xf32>, vector<128x256xf32>, vector<104x256xf32> -> vector<104x256xf32>
    %8 = arith.maximumf %3, %7 : vector<104x256xf32>
    %c0_9 = arith.constant 0 : index
    %c0_10 = arith.constant 0 : index
    %9 = vector.load %arg3[%c0_9, %c0_10] : memref<1x256xf32, #tpu.memory_space<vmem>>, vector<1x256xf32>
    %10 = vector.broadcast %9 : vector<1x256xf32> to vector<104x256xf32>
    %11 = arith.addf %8, %10 : vector<104x256xf32>
    %cst_11 = arith.constant 0.000000e+00 : f32
    %12 = vector.broadcast %cst_11 : f32 to vector<104x256xf32>
    %13 = arith.maximumf %11, %12 : vector<104x256xf32>
    %14 = vector.extract_strided_slice %13 {offsets = [0, 0], sizes = [104, 128], strides = [1, 1]} : vector<104x256xf32> to vector<104x128xf32>
    %15 = vector.extract_strided_slice %13 {offsets = [0, 128], sizes = [104, 128], strides = [1, 1]} : vector<104x256xf32> to vector<104x128xf32>
    %16 = arith.maximumf %14, %15 : vector<104x128xf32>
    %cst_12 = arith.constant 0.000000e+00 : f32
    %17 = vector.broadcast %cst_12 : f32 to vector<8x128xf32>
    %18 = tpu.concatenate %16, %17 in 0 : vector<104x128xf32>, vector<8x128xf32> -> vector<112x128xf32>
    %19 = vector.extract_strided_slice %18 {offsets = [0, 0], sizes = [104, 128], strides = [1, 1]} : vector<112x128xf32> to vector<104x128xf32>
    %c0_13 = arith.constant 0 : index
    %c0_14 = arith.constant 0 : index
    %c0_15 = arith.constant 0 : index
    %20 = vector.load %arg4[%c0_13, %c0_14, %c0_15] : memref<5x128x128xf32, #tpu.memory_space<vmem>>, vector<1x128x128xf32>
    %21 = vector.shape_cast %20 : vector<1x128x128xf32> to vector<128x128xf32>
    %cst_16 = arith.constant dense<0.000000e+00> : vector<104x128xf32>
    %22 = tpu.matmul %19, %21, %cst_16 {dimension_numbers = #tpu.dot_dimension_numbers<[1], [0], [0], [1], [0, 0, 1, 1], [], []>} : vector<104x128xf32>, vector<128x128xf32>, vector<104x128xf32> -> vector<104x128xf32>
    %23 = vector.extract_strided_slice %18 {offsets = [1, 0], sizes = [104, 128], strides = [1, 1]} : vector<112x128xf32> to vector<104x128xf32>
    %c1_17 = arith.constant 1 : index
    %c0_18 = arith.constant 0 : index
    %c0_19 = arith.constant 0 : index
    %24 = vector.load %arg4[%c1_17, %c0_18, %c0_19] : memref<5x128x128xf32, #tpu.memory_space<vmem>>, vector<1x128x128xf32>
    %25 = vector.shape_cast %24 : vector<1x128x128xf32> to vector<128x128xf32>
    %cst_20 = arith.constant dense<0.000000e+00> : vector<104x128xf32>
    %26 = tpu.matmul %23, %25, %cst_20 {dimension_numbers = #tpu.dot_dimension_numbers<[1], [0], [0], [1], [0, 0, 1, 1], [], []>} : vector<104x128xf32>, vector<128x128xf32>, vector<104x128xf32> -> vector<104x128xf32>
    %27 = arith.addf %22, %26 : vector<104x128xf32>
    %28 = vector.extract_strided_slice %18 {offsets = [2, 0], sizes = [104, 128], strides = [1, 1]} : vector<112x128xf32> to vector<104x128xf32>
    %c2 = arith.constant 2 : index
    %c0_21 = arith.constant 0 : index
    %c0_22 = arith.constant 0 : index
    %29 = vector.load %arg4[%c2, %c0_21, %c0_22] : memref<5x128x128xf32, #tpu.memory_space<vmem>>, vector<1x128x128xf32>
    %30 = vector.shape_cast %29 : vector<1x128x128xf32> to vector<128x128xf32>
    %cst_23 = arith.constant dense<0.000000e+00> : vector<104x128xf32>
    %31 = tpu.matmul %28, %30, %cst_23 {dimension_numbers = #tpu.dot_dimension_numbers<[1], [0], [0], [1], [0, 0, 1, 1], [], []>} : vector<104x128xf32>, vector<128x128xf32>, vector<104x128xf32> -> vector<104x128xf32>
    %32 = arith.addf %27, %31 : vector<104x128xf32>
    %33 = vector.extract_strided_slice %18 {offsets = [3, 0], sizes = [104, 128], strides = [1, 1]} : vector<112x128xf32> to vector<104x128xf32>
    %c3 = arith.constant 3 : index
    %c0_24 = arith.constant 0 : index
    %c0_25 = arith.constant 0 : index
    %34 = vector.load %arg4[%c3, %c0_24, %c0_25] : memref<5x128x128xf32, #tpu.memory_space<vmem>>, vector<1x128x128xf32>
    %35 = vector.shape_cast %34 : vector<1x128x128xf32> to vector<128x128xf32>
    %cst_26 = arith.constant dense<0.000000e+00> : vector<104x128xf32>
    %36 = tpu.matmul %33, %35, %cst_26 {dimension_numbers = #tpu.dot_dimension_numbers<[1], [0], [0], [1], [0, 0, 1, 1], [], []>} : vector<104x128xf32>, vector<128x128xf32>, vector<104x128xf32> -> vector<104x128xf32>
    %37 = arith.addf %32, %36 : vector<104x128xf32>
    %38 = vector.extract_strided_slice %18 {offsets = [4, 0], sizes = [104, 128], strides = [1, 1]} : vector<112x128xf32> to vector<104x128xf32>
    %c4 = arith.constant 4 : index
    %c0_27 = arith.constant 0 : index
    %c0_28 = arith.constant 0 : index
    %39 = vector.load %arg4[%c4, %c0_27, %c0_28] : memref<5x128x128xf32, #tpu.memory_space<vmem>>, vector<1x128x128xf32>
    %40 = vector.shape_cast %39 : vector<1x128x128xf32> to vector<128x128xf32>
    %cst_29 = arith.constant dense<0.000000e+00> : vector<104x128xf32>
    %41 = tpu.matmul %38, %40, %cst_29 {dimension_numbers = #tpu.dot_dimension_numbers<[1], [0], [0], [1], [0, 0, 1, 1], [], []>} : vector<104x128xf32>, vector<128x128xf32>, vector<104x128xf32> -> vector<104x128xf32>
    %42 = arith.addf %37, %41 : vector<104x128xf32>
    %c0_30 = arith.constant 0 : index
    %c0_31 = arith.constant 0 : index
    %43 = vector.load %arg5[%c0_30, %c0_31] : memref<1x128xf32, #tpu.memory_space<vmem>>, vector<1x128xf32>
    %44 = vector.broadcast %43 : vector<1x128xf32> to vector<104x128xf32>
    %45 = arith.addf %42, %44 : vector<104x128xf32>
    %cst_32 = arith.constant 0.000000e+00 : f32
    %46 = vector.broadcast %cst_32 : f32 to vector<104x128xf32>
    %47 = arith.maximumf %45, %46 : vector<104x128xf32>
    %c0_33 = arith.constant 0 : index
    %c0_34 = arith.constant 0 : index
    %c0_35 = arith.constant 0 : index
    %48 = vector.load %arg6[%c0_33, %c0_34, %c0_35] : memref<2x32x104xf32, #tpu.memory_space<vmem>>, vector<1x32x104xf32>
    %49 = vector.shape_cast %48 : vector<1x32x104xf32> to vector<32x104xf32>
    %cst_36 = arith.constant dense<0.000000e+00> : vector<32x128xf32>
    %50 = tpu.matmul %49, %47, %cst_36 {dimension_numbers = #tpu.dot_dimension_numbers<[1], [0], [0], [1], [0, 0, 1, 1], [], []>} : vector<32x104xf32>, vector<104x128xf32>, vector<32x128xf32> -> vector<32x128xf32>
    %c1_37 = arith.constant 1 : index
    %c0_38 = arith.constant 0 : index
    %c0_39 = arith.constant 0 : index
    %51 = vector.load %arg6[%c1_37, %c0_38, %c0_39] : memref<2x32x104xf32, #tpu.memory_space<vmem>>, vector<1x32x104xf32>
    %52 = vector.shape_cast %51 : vector<1x32x104xf32> to vector<32x104xf32>
    %cst_40 = arith.constant dense<0.000000e+00> : vector<32x128xf32>
    %53 = tpu.matmul %52, %47, %cst_40 {dimension_numbers = #tpu.dot_dimension_numbers<[1], [0], [0], [1], [0, 0, 1, 1], [], []>} : vector<32x104xf32>, vector<104x128xf32>, vector<32x128xf32> -> vector<32x128xf32>
    %54 = arith.maximumf %50, %53 : vector<32x128xf32>
    %c0_41 = arith.constant 0 : index
    %c0_42 = arith.constant 0 : index
    %c0_43 = arith.constant 0 : index
    %55 = vector.load %arg7[%c0_41, %c0_42, %c0_43] : memref<2x128x128xf32, #tpu.memory_space<vmem>>, vector<1x128x128xf32>
    %56 = vector.shape_cast %55 : vector<1x128x128xf32> to vector<128x128xf32>
    %cst_44 = arith.constant dense<0.000000e+00> : vector<32x128xf32>
    %57 = tpu.matmul %54, %56, %cst_44 {dimension_numbers = #tpu.dot_dimension_numbers<[1], [0], [0], [1], [0, 0, 1, 1], [], []>} : vector<32x128xf32>, vector<128x128xf32>, vector<32x128xf32> -> vector<32x128xf32>
    %c1_45 = arith.constant 1 : index
    %c0_46 = arith.constant 0 : index
    %c0_47 = arith.constant 0 : index
    %58 = vector.load %arg7[%c1_45, %c0_46, %c0_47] : memref<2x128x128xf32, #tpu.memory_space<vmem>>, vector<1x128x128xf32>
    %59 = vector.shape_cast %58 : vector<1x128x128xf32> to vector<128x128xf32>
    %cst_48 = arith.constant dense<0.000000e+00> : vector<32x128xf32>
    %60 = tpu.matmul %54, %59, %cst_48 {dimension_numbers = #tpu.dot_dimension_numbers<[1], [0], [0], [1], [0, 0, 1, 1], [], []>} : vector<32x128xf32>, vector<128x128xf32>, vector<32x128xf32> -> vector<32x128xf32>
    %61 = arith.maximumf %57, %60 : vector<32x128xf32>
    %62 = vector.extract_strided_slice %61 {offsets = [0, 0], sizes = [8, 128], strides = [1, 1]} : vector<32x128xf32> to vector<8x128xf32>
    %63 = vector.extract_strided_slice %61 {offsets = [8, 0], sizes = [8, 128], strides = [1, 1]} : vector<32x128xf32> to vector<8x128xf32>
    %64 = vector.extract_strided_slice %61 {offsets = [16, 0], sizes = [8, 128], strides = [1, 1]} : vector<32x128xf32> to vector<8x128xf32>
    %65 = vector.extract_strided_slice %61 {offsets = [24, 0], sizes = [8, 128], strides = [1, 1]} : vector<32x128xf32> to vector<8x128xf32>
    %66 = tpu.concatenate %62, %63, %64, %65 in 1 : vector<8x128xf32>, vector<8x128xf32>, vector<8x128xf32>, vector<8x128xf32> -> vector<8x512xf32>
    %c0_49 = arith.constant 0 : index
    %c0_50 = arith.constant 0 : index
    %67 = vector.load %arg8[%c0_49, %c0_50] : memref<512x128xf32, #tpu.memory_space<vmem>>, vector<512x128xf32>
    %cst_51 = arith.constant dense<0.000000e+00> : vector<8x128xf32>
    %68 = tpu.matmul %66, %67, %cst_51 {dimension_numbers = #tpu.dot_dimension_numbers<[1], [0], [0], [1], [0, 0, 1, 1], [], []>} : vector<8x512xf32>, vector<512x128xf32>, vector<8x128xf32> -> vector<8x128xf32>
    %c0_52 = arith.constant 0 : index
    %c0_53 = arith.constant 0 : index
    %69 = vector.load %arg9[%c0_52, %c0_53] : memref<1x128xf32, #tpu.memory_space<vmem>>, vector<1x128xf32>
    %70 = vector.broadcast %69 : vector<1x128xf32> to vector<8x128xf32>
    %71 = arith.addf %68, %70 : vector<8x128xf32>
    %cst_54 = arith.constant 0.000000e+00 : f32
    %72 = vector.broadcast %cst_54 : f32 to vector<8x128xf32>
    %73 = arith.maximumf %71, %72 : vector<8x128xf32>
    %c0_55 = arith.constant 0 : index
    %c0_56 = arith.constant 0 : index
    %74 = vector.load %arg10[%c0_55, %c0_56] : memref<128x128xf32, #tpu.memory_space<vmem>>, vector<128x128xf32>
    %cst_57 = arith.constant dense<0.000000e+00> : vector<8x128xf32>
    %75 = tpu.matmul %73, %74, %cst_57 {dimension_numbers = #tpu.dot_dimension_numbers<[1], [0], [0], [1], [0, 0, 1, 1], [], []>} : vector<8x128xf32>, vector<128x128xf32>, vector<8x128xf32> -> vector<8x128xf32>
    %c0_58 = arith.constant 0 : index
    %c0_59 = arith.constant 0 : index
    %76 = vector.load %arg11[%c0_58, %c0_59] : memref<1x128xf32, #tpu.memory_space<vmem>>, vector<1x128xf32>
    %77 = vector.broadcast %76 : vector<1x128xf32> to vector<8x128xf32>
    %78 = arith.addf %75, %77 : vector<8x128xf32>
    %c0_60 = arith.constant 0 : index
    %c0_61 = arith.constant 0 : index
    %79 = vector.load %arg12[%c0_60, %c0_61] : memref<8x128xf32, #tpu.memory_space<vmem>>, vector<8x128xf32>
    tpu.vector_store %arg12[%c0_60, %c0_61], %78 {strides = array<i32>} : memref<8x128xf32, #tpu.memory_space<vmem>>, vector<8x128xf32>,
    return
  }
  func.func @transform_0(%arg0: i32) -> (i32, i32, i32) {
    %c0_i32 = arith.constant 0 : i32
    %c0_i32_0 = arith.constant 0 : i32
    %c0_i32_1 = arith.constant 0 : i32
    return %c0_i32, %arg0, %c0_i32_0 : i32, i32, i32
  }
  func.func @transform_1(%arg0: i32) -> (i32, i32) {
    %c0_i32 = arith.constant 0 : i32
    %c0_i32_0 = arith.constant 0 : i32
    %c0_i32_1 = arith.constant 0 : i32
    return %c0_i32, %c0_i32_0 : i32, i32
  }
  func.func @transform_2(%arg0: i32) -> (i32, i32) {
    %c0_i32 = arith.constant 0 : i32
    %c0_i32_0 = arith.constant 0 : i32
    %c0_i32_1 = arith.constant 0 : i32
    return %c0_i32, %c0_i32_0 : i32, i32
  }
  func.func @transform_3(%arg0: i32) -> (i32, i32, i32) {
    %c0_i32 = arith.constant 0 : i32
    %c0_i32_0 = arith.constant 0 : i32
    %c0_i32_1 = arith.constant 0 : i32
    %c0_i32_2 = arith.constant 0 : i32
    return %c0_i32, %c0_i32_0, %c0_i32_1 : i32, i32, i32
  }
  func.func @transform_4(%arg0: i32) -> (i32, i32) {
    %c0_i32 = arith.constant 0 : i32
    %c0_i32_0 = arith.constant 0 : i32
    %c0_i32_1 = arith.constant 0 : i32
    return %c0_i32, %c0_i32_0 : i32, i32
  }
  func.func @transform_5(%arg0: i32) -> (i32, i32, i32) {
    %c0_i32 = arith.constant 0 : i32
    %c0_i32_0 = arith.constant 0 : i32
    %c0_i32_1 = arith.constant 0 : i32
    %c0_i32_2 = arith.constant 0 : i32
    return %c0_i32, %c0_i32_0, %c0_i32_1 : i32, i32, i32
  }
  func.func @transform_6(%arg0: i32) -> (i32, i32, i32) {
    %c0_i32 = arith.constant 0 : i32
    %c0_i32_0 = arith.constant 0 : i32
    %c0_i32_1 = arith.constant 0 : i32
    %c0_i32_2 = arith.constant 0 : i32
    return %c0_i32, %c0_i32_0, %c0_i32_1 : i32, i32, i32
  }
  func.func @transform_7(%arg0: i32) -> (i32, i32) {
    %c0_i32 = arith.constant 0 : i32
    %c0_i32_0 = arith.constant 0 : i32
    %c0_i32_1 = arith.constant 0 : i32
    return %c0_i32, %c0_i32_0 : i32, i32
  }
  func.func @transform_8(%arg0: i32) -> (i32, i32) {
    %c0_i32 = arith.constant 0 : i32
    %c0_i32_0 = arith.constant 0 : i32
    %c0_i32_1 = arith.constant 0 : i32
    return %c0_i32, %c0_i32_0 : i32, i32
  }
  func.func @transform_9(%arg0: i32) -> (i32, i32) {
    %c0_i32 = arith.constant 0 : i32
    %c0_i32_0 = arith.constant 0 : i32
    %c0_i32_1 = arith.constant 0 : i32
    return %c0_i32, %c0_i32_0 : i32, i32
  }
  func.func @transform_10(%arg0: i32) -> (i32, i32) {
    %c0_i32 = arith.constant 0 : i32
    %c0_i32_0 = arith.constant 0 : i32
    %c0_i32_1 = arith.constant 0 : i32
    return %c0_i32, %c0_i32_0 : i32, i32
  }
  func.func @transform_11(%arg0: i32) -> (i32, i32) {
    %c0_i32 = arith.constant 0 : i32
    %c0_i32_0 = arith.constant 0 : i32
    return %arg0, %c0_i32 : i32, i32
  }
}

</mosaic_0001>

<llo_original>
// kernel: network_forward.1
$region0: #{network_forward.1}
  #allocation0 [shape = 'u32[]', space=smem, size = 0x4, offset = 0x4, fixed_abs, tag = 'smem constant byte address 0x4 - core index']
  #allocation1 [shape = 'u32[144,128]{1,0:T(1,128)}', space=vmem, size = 0x12000, scoped, tag = 'internal scratch']
  %s0 = inlined_call_operand.vmem [shape: f32[2,104,128], index: 0, kind: input, shape index: {}]
  %s1 = inlined_call_operand.vmem [shape: f32[128,256], index: 1, kind: input, shape index: {}]
  %s2 = inlined_call_operand.vmem [shape: f32[1,256], index: 2, kind: input, shape index: {}]
  %s3 = inlined_call_operand.vmem [shape: f32[5,128,128], index: 3, kind: input, shape index: {}]
  %s4 = inlined_call_operand.vmem [shape: f32[1,128], index: 4, kind: input, shape index: {}]
  %s5 = inlined_call_operand.vmem [shape: f32[2,32,104], index: 5, kind: input, shape index: {}]
  %s6 = inlined_call_operand.vmem [shape: f32[2,128,128], index: 6, kind: input, shape index: {}]
  %s7 = inlined_call_operand.vmem [shape: f32[512,128], index: 7, kind: input, shape index: {}]
  %s8 = inlined_call_operand.vmem [shape: f32[1,128], index: 8, kind: input, shape index: {}]
  %s9 = inlined_call_operand.vmem [shape: f32[128,128], index: 9, kind: input, shape index: {}]
  %s10 = inlined_call_operand.vmem [shape: f32[1,128], index: 10, kind: input, shape index: {}]
  %s11 = inlined_call_operand.vmem [shape: f32[8,128], index: 11, kind: output, shape index: {}]
  %s12 = sld [smem:[#allocation0]]
  $region54: #{network_forward.1} parent=0
    _
  %s14 = ssub.s32 1, %s12
  %s15 = scalar_select 0, %s14, %s12
  // Predicated region
  $region2: #{network_forward.1} parent=0 // pred_check
    _
  $region3: #{network_forward.1} parent=0 // pred_check_branch
    %17 = sbr.rel (0) target = $region5
  $region4: #{network_forward.1} parent=0 // pred_region
    _
  $region5: #{network_forward.1} parent=0 // pred_fallthru
    _
  // Predicated region
  $region6: #{network_forward.1} parent=0 // pred_check
    _
  $region7: #{network_forward.1} parent=0 // pred_check_branch
    %19 = sbr.rel (0) target = $region9
  $region8: #{network_forward.1} parent=0 // pred_region
    _
  $region9: #{network_forward.1} parent=0 // pred_fallthru
    _
  // Predicated region
  $region10: #{network_forward.1} parent=0 // pred_check
    _
  $region11: #{network_forward.1} parent=0 // pred_check_branch
    %21 = sbr.rel (0) target = $region13
  $region12: #{network_forward.1} parent=0 // pred_region
    _
  $region13: #{network_forward.1} parent=0 // pred_fallthru
    _
  // Predicated region
  $region14: #{network_forward.1} parent=0 // pred_check
    _
  $region15: #{network_forward.1} parent=0 // pred_check_branch
    %23 = sbr.rel (0) target = $region17
  $region16: #{network_forward.1} parent=0 // pred_region
    _
  $region17: #{network_forward.1} parent=0 // pred_fallthru
    _
  // Predicated region
  $region18: #{network_forward.1} parent=0 // pred_check
    _
  $region19: #{network_forward.1} parent=0 // pred_check_branch
    %25 = sbr.rel (0) target = $region21
  $region20: #{network_forward.1} parent=0 // pred_region
    _
  $region21: #{network_forward.1} parent=0 // pred_fallthru
    _
  // Predicated region
  $region22: #{network_forward.1} parent=0 // pred_check
    _
  $region23: #{network_forward.1} parent=0 // pred_check_branch
    %27 = sbr.rel (0) target = $region25
  $region24: #{network_forward.1} parent=0 // pred_region
    _
  $region25: #{network_forward.1} parent=0 // pred_fallthru
    _
  // Predicated region
  $region26: #{network_forward.1} parent=0 // pred_check
    _
  $region27: #{network_forward.1} parent=0 // pred_check_branch
    %29 = sbr.rel (0) target = $region29
  $region28: #{network_forward.1} parent=0 // pred_region
    _
  $region29: #{network_forward.1} parent=0 // pred_fallthru
    _
  // Predicated region
  $region30: #{network_forward.1} parent=0 // pred_check
    _
  $region31: #{network_forward.1} parent=0 // pred_check_branch
    %31 = sbr.rel (0) target = $region33
  $region32: #{network_forward.1} parent=0 // pred_region
    _
  $region33: #{network_forward.1} parent=0 // pred_fallthru
    _
  // Predicated region
  $region34: #{network_forward.1} parent=0 // pred_check
    _
  $region35: #{network_forward.1} parent=0 // pred_check_branch
    %33 = sbr.rel (0) target = $region37
  $region36: #{network_forward.1} parent=0 // pred_region
    _
  $region37: #{network_forward.1} parent=0 // pred_fallthru
    _
  // Predicated region
  $region38: #{network_forward.1} parent=0 // pred_check
    _
  $region39: #{network_forward.1} parent=0 // pred_check_branch
    %35 = sbr.rel (0) target = $region41
  $region40: #{network_forward.1} parent=0 // pred_region
    _
  $region41: #{network_forward.1} parent=0 // pred_fallthru
    _
  // Predicated region
  $region42: #{network_forward.1} parent=0 // pred_check
    _
  $region43: #{network_forward.1} parent=0 // pred_check_branch
    %37 = sbr.rel (0) target = $region45
  $region44: #{network_forward.1} parent=0 // pred_region
    _
  $region45: #{network_forward.1} parent=0 // pred_fallthru
    _
  %v38 = vld [vmem:[%s0] sm:$0xff]
  %v39 = vld [vmem:[%s0 + $0x8] sm:$0xff]
  %v40 = vld [vmem:[%s0 + $0x10] sm:$0xff]
  %v41 = vld [vmem:[%s0 + $0x18] sm:$0xff]
  %v42 = vld [vmem:[%s0 + $0x20] sm:$0xff]
  %v43 = vld [vmem:[%s0 + $0x28] sm:$0xff]
  %v44 = vld [vmem:[%s0 + $0x30] sm:$0xff]
  %v45 = vld [vmem:[%s0 + $0x38] sm:$0xff]
  %v46 = vld [vmem:[%s0 + $0x40] sm:$0xff]
  %v47 = vld [vmem:[%s0 + $0x48] sm:$0xff]
  %v48 = vld [vmem:[%s0 + $0x50] sm:$0xff]
  %v49 = vld [vmem:[%s0 + $0x58] sm:$0xff]
  %v50 = vld [vmem:[%s0 + $0x60] sm:$0xff]
  %v51 = vld [vmem:[%s1] sm:$0xff]
  %v52 = vld [vmem:[%s1 + $0x8] sm:$0xff]
  %v53 = vld [vmem:[%s1 + $0x10] sm:$0xff]
  %v54 = vld [vmem:[%s1 + $0x18] sm:$0xff]
  %v55 = vld [vmem:[%s1 + $0x20] sm:$0xff]
  %v56 = vld [vmem:[%s1 + $0x28] sm:$0xff]
  %v57 = vld [vmem:[%s1 + $0x30] sm:$0xff]
  %v58 = vld [vmem:[%s1 + $0x38] sm:$0xff]
  %v59 = vld [vmem:[%s1 + $0x40] sm:$0xff]
  %v60 = vld [vmem:[%s1 + $0x48] sm:$0xff]
  %v61 = vld [vmem:[%s1 + $0x50] sm:$0xff]
  %v62 = vld [vmem:[%s1 + $0x58] sm:$0xff]
  %v63 = vld [vmem:[%s1 + $0x60] sm:$0xff]
  %v64 = vld [vmem:[%s1 + $0x68] sm:$0xff]
  %v65 = vld [vmem:[%s1 + $0x70] sm:$0xff]
  %v66 = vld [vmem:[%s1 + $0x78] sm:$0xff]
  %v67 = vld [vmem:[%s1 + $0x80] sm:$0xff]
  %v68 = vld [vmem:[%s1 + $0x88] sm:$0xff]
  %v69 = vld [vmem:[%s1 + $0x90] sm:$0xff]
  %v70 = vld [vmem:[%s1 + $0x98] sm:$0xff]
  %v71 = vld [vmem:[%s1 + $0xa0] sm:$0xff]
  %v72 = vld [vmem:[%s1 + $0xa8] sm:$0xff]
  %v73 = vld [vmem:[%s1 + $0xb0] sm:$0xff]
  %v74 = vld [vmem:[%s1 + $0xb8] sm:$0xff]
  %v75 = vld [vmem:[%s1 + $0xc0] sm:$0xff]
  %v76 = vld [vmem:[%s1 + $0xc8] sm:$0xff]
  %v77 = vld [vmem:[%s1 + $0xd0] sm:$0xff]
  %v78 = vld [vmem:[%s1 + $0xd8] sm:$0xff]
  %v79 = vld [vmem:[%s1 + $0xe0] sm:$0xff]
  %v80 = vld [vmem:[%s1 + $0xe8] sm:$0xff]
  %v81 = vld [vmem:[%s1 + $0xf0] sm:$0xff]
  %v82 = vld [vmem:[%s1 + $0xf8] sm:$0xff]
  %83 = vmatprep.subr.mxu0 %v82
  %84 = vmatpush1.msra.mxu0 %v81
  %85 = vmatprep.subr.mxu0 %v80
  %86 = vmatpush1.msra.mxu0 %v79
  %87 = vmatprep.subr.mxu0 %v78
  %88 = vmatpush1.msra.mxu0 %v77
  %89 = vmatprep.subr.mxu0 %v76
  %90 = vmatpush1.msra.mxu0 %v75
  %91 = vmatprep.subr.mxu0 %v74
  %92 = vmatpush1.msra.mxu0 %v73
  %93 = vmatprep.subr.mxu0 %v72
  %94 = vmatpush1.msra.mxu0 %v71
  %95 = vmatprep.subr.mxu0 %v70
  %96 = vmatpush1.msra.mxu0 %v69
  %97 = vmatprep.subr.mxu0 %v68
  %98 = vmatpush1.msra.mxu0 %v67
  %99 = vmatprep.subr.mxu0 %v66
  %100 = vmatpush1.msra.mxu0 %v65
  %101 = vmatprep.subr.mxu0 %v64
  %102 = vmatpush1.msra.mxu0 %v63
  %103 = vmatprep.subr.mxu0 %v62
  %104 = vmatpush1.msra.mxu0 %v61
  %105 = vmatprep.subr.mxu0 %v60
  %106 = vmatpush1.msra.mxu0 %v59
  %107 = vmatprep.subr.mxu0 %v58
  %108 = vmatpush1.msra.mxu0 %v57
  %109 = vmatprep.subr.mxu0 %v56
  %110 = vmatpush1.msra.mxu0 %v55
  %111 = vmatprep.subr.mxu0 %v54
  %112 = vmatpush1.msra.mxu0 %v53
  %113 = vmatprep.subr.mxu0 %v52
  %114 = vmatpush1.msra.mxu0 %v51
  %115 = vmatprep.subr.mxu0 0.0
  %116 = vmatpush2.msra.mxu0 0.0
  %117 = vmatprep.subr.mxu0 0.0
  %118 = vmatpush2.msra.mxu0 0.0
  %119 = vmatprep.subr.mxu0 0.0
  %120 = vmatpush2.msra.mxu0 0.0
  %121 = vmatprep.subr.mxu0 0.0
  %122 = vmatpush2.msra.mxu0 0.0
  %123 = vmatprep.subr.mxu0 0.0
  %124 = vmatpush2.msra.mxu0 0.0
  %125 = vmatprep.subr.mxu0 0.0
  %126 = vmatpush2.msra.mxu0 0.0
  %127 = vmatprep.subr.mxu0 0.0
  %128 = vmatpush2.msra.mxu0 0.0
  %129 = vmatprep.subr.mxu0 0.0
  %130 = vmatpush2.msra.mxu0 0.0
  %131 = vmatprep.subr.mxu0 0.0
  %132 = vmatpush2.msra.mxu0 0.0
  %133 = vmatprep.subr.mxu0 0.0
  %134 = vmatpush2.msra.mxu0 0.0
  %135 = vmatprep.subr.mxu0 0.0
  %136 = vmatpush2.msra.mxu0 0.0
  %137 = vmatprep.subr.mxu0 0.0
  %138 = vmatpush2.msra.mxu0 0.0
  %139 = vmatprep.subr.mxu0 0.0
  %140 = vmatpush2.msra.mxu0 0.0
  %141 = vmatprep.subr.mxu0 0.0
  %142 = vmatpush2.msra.mxu0 0.0
  %143 = vmatprep.subr.mxu0 0.0
  %144 = vmatpush2.msra.mxu0 0.0
  %145 = vmatprep.subr.mxu0 0.0
  %146 = vmatpush2.msra.mxu0 0.0
  %147 = vmatprep.mubr.f32.mxu0 0.0
  %148 = vmatmul.mubr.f32.gmra.mxu0 %v38
  %v149 = vpop.f32.mrf.mxu0
  %v150 = vadd.f32 0.0, %v149
  %v151 = vpop.f32.mrf.mxu0
  %v152 = vadd.f32 0.0, %v151
  %153 = vmatprep.mubr.f32.mxu0 0.0
  %154 = vmatmul.mubr.f32.gmra.mxu0 %v39
  %v155 = vpop.f32.mrf.mxu0
  %v156 = vadd.f32 0.0, %v155
  %v157 = vpop.f32.mrf.mxu0
  %v158 = vadd.f32 0.0, %v157
  %159 = vmatprep.mubr.f32.mxu0 0.0
  %160 = vmatmul.mubr.f32.gmra.mxu0 %v40
  %v161 = vpop.f32.mrf.mxu0
  %v162 = vadd.f32 0.0, %v161
  %v163 = vpop.f32.mrf.mxu0
  %v164 = vadd.f32 0.0, %v163
  %165 = vmatprep.mubr.f32.mxu0 0.0
  %166 = vmatmul.mubr.f32.gmra.mxu0 %v41
  %v167 = vpop.f32.mrf.mxu0
  %v168 = vadd.f32 0.0, %v167
  %v169 = vpop.f32.mrf.mxu0
  %v170 = vadd.f32 0.0, %v169
  %171 = vmatprep.mubr.f32.mxu0 0.0
  %172 = vmatmul.mubr.f32.gmra.mxu0 %v42
  %v173 = vpop.f32.mrf.mxu0
  %v174 = vadd.f32 0.0, %v173
  %v175 = vpop.f32.mrf.mxu0
  %v176 = vadd.f32 0.0, %v175
  %177 = vmatprep.mubr.f32.mxu0 0.0
  %178 = vmatmul.mubr.f32.gmra.mxu0 %v43
  %v179 = vpop.f32.mrf.mxu0
  %v180 = vadd.f32 0.0, %v179
  %v181 = vpop.f32.mrf.mxu0
  %v182 = vadd.f32 0.0, %v181
  %183 = vmatprep.mubr.f32.mxu0 0.0
  %184 = vmatmul.mubr.f32.gmra.mxu0 %v44
  %v185 = vpop.f32.mrf.mxu0
  %v186 = vadd.f32 0.0, %v185
  %v187 = vpop.f32.mrf.mxu0
  %v188 = vadd.f32 0.0, %v187
  %189 = vmatprep.mubr.f32.mxu0 0.0
  %190 = vmatmul.mubr.f32.gmra.mxu0 %v45
  %v191 = vpop.f32.mrf.mxu0
  %v192 = vadd.f32 0.0, %v191
  %v193 = vpop.f32.mrf.mxu0
  %v194 = vadd.f32 0.0, %v193
  %195 = vmatprep.mubr.f32.mxu0 0.0
  %196 = vmatmul.mubr.f32.gmra.mxu0 %v46
  %v197 = vpop.f32.mrf.mxu0
  %v198 = vadd.f32 0.0, %v197
  %v199 = vpop.f32.mrf.mxu0
  %v200 = vadd.f32 0.0, %v199
  %201 = vmatprep.mubr.f32.mxu0 0.0
  %202 = vmatmul.mubr.f32.gmra.mxu0 %v47
  %v203 = vpop.f32.mrf.mxu0
  %v204 = vadd.f32 0.0, %v203
  %v205 = vpop.f32.mrf.mxu0
  %v206 = vadd.f32 0.0, %v205
  %207 = vmatprep.mubr.f32.mxu0 0.0
  %208 = vmatmul.mubr.f32.gmra.mxu0 %v48
  %v209 = vpop.f32.mrf.mxu0
  %v210 = vadd.f32 0.0, %v209
  %v211 = vpop.f32.mrf.mxu0
  %v212 = vadd.f32 0.0, %v211
  %213 = vmatprep.mubr.f32.mxu0 0.0
  %214 = vmatmul.mubr.f32.gmra.mxu0 %v49
  %v215 = vpop.f32.mrf.mxu0
  %v216 = vadd.f32 0.0, %v215
  %v217 = vpop.f32.mrf.mxu0
  %v218 = vadd.f32 0.0, %v217
  %219 = vmatprep.mubr.f32.mxu0 0.0
  %220 = vmatmul.mubr.f32.gmra.mxu0 %v50
  %v221 = vpop.f32.mrf.mxu0
  %v222 = vadd.f32 0.0, %v221
  %v223 = vpop.f32.mrf.mxu0
  %v224 = vadd.f32 0.0, %v223
  %225 = vdwg.mxu0
  %s226 = scalar_lea.vmem %s0, 104
  %v227 = vld [vmem:[%s226] sm:$0xff]
  %v228 = vld [vmem:[%s226 + $0x8] sm:$0xff]
  %v229 = vld [vmem:[%s226 + $0x10] sm:$0xff]
  %v230 = vld [vmem:[%s226 + $0x18] sm:$0xff]
  %v231 = vld [vmem:[%s226 + $0x20] sm:$0xff]
  %v232 = vld [vmem:[%s226 + $0x28] sm:$0xff]
  %v233 = vld [vmem:[%s226 + $0x30] sm:$0xff]
  %v234 = vld [vmem:[%s226 + $0x38] sm:$0xff]
  %v235 = vld [vmem:[%s226 + $0x40] sm:$0xff]
  %v236 = vld [vmem:[%s226 + $0x48] sm:$0xff]
  %v237 = vld [vmem:[%s226 + $0x50] sm:$0xff]
  %v238 = vld [vmem:[%s226 + $0x58] sm:$0xff]
  %v239 = vld [vmem:[%s226 + $0x60] sm:$0xff]
  %240 = vmatprep.subr.mxu0 %v82
  %241 = vmatpush1.msra.mxu0 %v81
  %242 = vmatprep.subr.mxu0 %v80
  %243 = vmatpush1.msra.mxu0 %v79
  %244 = vmatprep.subr.mxu0 %v78
  %245 = vmatpush1.msra.mxu0 %v77
  %246 = vmatprep.subr.mxu0 %v76
  %247 = vmatpush1.msra.mxu0 %v75
  %248 = vmatprep.subr.mxu0 %v74
  %249 = vmatpush1.msra.mxu0 %v73
  %250 = vmatprep.subr.mxu0 %v72
  %251 = vmatpush1.msra.mxu0 %v71
  %252 = vmatprep.subr.mxu0 %v70
  %253 = vmatpush1.msra.mxu0 %v69
  %254 = vmatprep.subr.mxu0 %v68
  %255 = vmatpush1.msra.mxu0 %v67
  %256 = vmatprep.subr.mxu0 %v66
  %257 = vmatpush1.msra.mxu0 %v65
  %258 = vmatprep.subr.mxu0 %v64
  %259 = vmatpush1.msra.mxu0 %v63
  %260 = vmatprep.subr.mxu0 %v62
  %261 = vmatpush1.msra.mxu0 %v61
  %262 = vmatprep.subr.mxu0 %v60
  %263 = vmatpush1.msra.mxu0 %v59
  %264 = vmatprep.subr.mxu0 %v58
  %265 = vmatpush1.msra.mxu0 %v57
  %266 = vmatprep.subr.mxu0 %v56
  %267 = vmatpush1.msra.mxu0 %v55
  %268 = vmatprep.subr.mxu0 %v54
  %269 = vmatpush1.msra.mxu0 %v53
  %270 = vmatprep.subr.mxu0 %v52
  %271 = vmatpush1.msra.mxu0 %v51
  %272 = vmatprep.subr.mxu0 0.0
  %273 = vmatpush2.msra.mxu0 0.0
  %274 = vmatprep.subr.mxu0 0.0
  %275 = vmatpush2.msra.mxu0 0.0
  %276 = vmatprep.subr.mxu0 0.0
  %277 = vmatpush2.msra.mxu0 0.0
  %278 = vmatprep.subr.mxu0 0.0
  %279 = vmatpush2.msra.mxu0 0.0
  %280 = vmatprep.subr.mxu0 0.0
  %281 = vmatpush2.msra.mxu0 0.0
  %282 = vmatprep.subr.mxu0 0.0
  %283 = vmatpush2.msra.mxu0 0.0
  %284 = vmatprep.subr.mxu0 0.0
  %285 = vmatpush2.msra.mxu0 0.0
  %286 = vmatprep.subr.mxu0 0.0
  %287 = vmatpush2.msra.mxu0 0.0
  %288 = vmatprep.subr.mxu0 0.0
  %289 = vmatpush2.msra.mxu0 0.0
  %290 = vmatprep.subr.mxu0 0.0
  %291 = vmatpush2.msra.mxu0 0.0
  %292 = vmatprep.subr.mxu0 0.0
  %293 = vmatpush2.msra.mxu0 0.0
  %294 = vmatprep.subr.mxu0 0.0
  %295 = vmatpush2.msra.mxu0 0.0
  %296 = vmatprep.subr.mxu0 0.0
  %297 = vmatpush2.msra.mxu0 0.0
  %298 = vmatprep.subr.mxu0 0.0
  %299 = vmatpush2.msra.mxu0 0.0
  %300 = vmatprep.subr.mxu0 0.0
  %301 = vmatpush2.msra.mxu0 0.0
  %302 = vmatprep.subr.mxu0 0.0
  %303 = vmatpush2.msra.mxu0 0.0
  %304 = vmatprep.mubr.f32.mxu0 0.0
  %305 = vmatmul.mubr.f32.gmra.mxu0 %v227
  %v306 = vpop.f32.mrf.mxu0
  %v307 = vadd.f32 0.0, %v306
  %v308 = vpop.f32.mrf.mxu0
  %v309 = vadd.f32 0.0, %v308
  %310 = vmatprep.mubr.f32.mxu0 0.0
  %311 = vmatmul.mubr.f32.gmra.mxu0 %v228
  %v312 = vpop.f32.mrf.mxu0
  %v313 = vadd.f32 0.0, %v312
  %v314 = vpop.f32.mrf.mxu0
  %v315 = vadd.f32 0.0, %v314
  %316 = vmatprep.mubr.f32.mxu0 0.0
  %317 = vmatmul.mubr.f32.gmra.mxu0 %v229
  %v318 = vpop.f32.mrf.mxu0
  %v319 = vadd.f32 0.0, %v318
  %v320 = vpop.f32.mrf.mxu0
  %v321 = vadd.f32 0.0, %v320
  %322 = vmatprep.mubr.f32.mxu0 0.0
  %323 = vmatmul.mubr.f32.gmra.mxu0 %v230
  %v324 = vpop.f32.mrf.mxu0
  %v325 = vadd.f32 0.0, %v324
  %v326 = vpop.f32.mrf.mxu0
  %v327 = vadd.f32 0.0, %v326
  %328 = vmatprep.mubr.f32.mxu0 0.0
  %329 = vmatmul.mubr.f32.gmra.mxu0 %v231
  %v330 = vpop.f32.mrf.mxu0
  %v331 = vadd.f32 0.0, %v330
  %v332 = vpop.f32.mrf.mxu0
  %v333 = vadd.f32 0.0, %v332
  %334 = vmatprep.mubr.f32.mxu0 0.0
  %335 = vmatmul.mubr.f32.gmra.mxu0 %v232
  %v336 = vpop.f32.mrf.mxu0
  %v337 = vadd.f32 0.0, %v336
  %v338 = vpop.f32.mrf.mxu0
  %v339 = vadd.f32 0.0, %v338
  %340 = vmatprep.mubr.f32.mxu0 0.0
  %341 = vmatmul.mubr.f32.gmra.mxu0 %v233
  %v342 = vpop.f32.mrf.mxu0
  %v343 = vadd.f32 0.0, %v342
  %v344 = vpop.f32.mrf.mxu0
  %v345 = vadd.f32 0.0, %v344
  %346 = vmatprep.mubr.f32.mxu0 0.0
  %347 = vmatmul.mubr.f32.gmra.mxu0 %v234
  %v348 = vpop.f32.mrf.mxu0
  %v349 = vadd.f32 0.0, %v348
  %v350 = vpop.f32.mrf.mxu0
  %v351 = vadd.f32 0.0, %v350
  %352 = vmatprep.mubr.f32.mxu0 0.0
  %353 = vmatmul.mubr.f32.gmra.mxu0 %v235
  %v354 = vpop.f32.mrf.mxu0
  %v355 = vadd.f32 0.0, %v354
  %v356 = vpop.f32.mrf.mxu0
  %v357 = vadd.f32 0.0, %v356
  %358 = vmatprep.mubr.f32.mxu0 0.0
  %359 = vmatmul.mubr.f32.gmra.mxu0 %v236
  %v360 = vpop.f32.mrf.mxu0
  %v361 = vadd.f32 0.0, %v360
  %v362 = vpop.f32.mrf.mxu0
  %v363 = vadd.f32 0.0, %v362
  %364 = vmatprep.mubr.f32.mxu0 0.0
  %365 = vmatmul.mubr.f32.gmra.mxu0 %v237
  %v366 = vpop.f32.mrf.mxu0
  %v367 = vadd.f32 0.0, %v366
  %v368 = vpop.f32.mrf.mxu0
  %v369 = vadd.f32 0.0, %v368
  %370 = vmatprep.mubr.f32.mxu0 0.0
  %371 = vmatmul.mubr.f32.gmra.mxu0 %v238
  %v372 = vpop.f32.mrf.mxu0
  %v373 = vadd.f32 0.0, %v372
  %v374 = vpop.f32.mrf.mxu0
  %v375 = vadd.f32 0.0, %v374
  %376 = vmatprep.mubr.f32.mxu0 0.0
  %377 = vmatmul.mubr.f32.gmra.mxu0 %v239
  %v378 = vpop.f32.mrf.mxu0
  %v379 = vadd.f32 0.0, %v378
  %v380 = vpop.f32.mrf.mxu0
  %v381 = vadd.f32 0.0, %v380
  %382 = vdwg.mxu0
  %v383 = vmax.f32 %v150, %v307
  %v384 = vmax.f32 %v152, %v309
  %v385 = vmax.f32 %v156, %v313
  %v386 = vmax.f32 %v158, %v315
  %v387 = vmax.f32 %v162, %v319
  %v388 = vmax.f32 %v164, %v321
  %v389 = vmax.f32 %v168, %v325
  %v390 = vmax.f32 %v170, %v327
  %v391 = vmax.f32 %v174, %v331
  %v392 = vmax.f32 %v176, %v333
  %v393 = vmax.f32 %v180, %v337
  %v394 = vmax.f32 %v182, %v339
  %v395 = vmax.f32 %v186, %v343
  %v396 = vmax.f32 %v188, %v345
  %v397 = vmax.f32 %v192, %v349
  %v398 = vmax.f32 %v194, %v351
  %v399 = vmax.f32 %v198, %v355
  %v400 = vmax.f32 %v200, %v357
  %v401 = vmax.f32 %v204, %v361
  %v402 = vmax.f32 %v206, %v363
  %v403 = vmax.f32 %v210, %v367
  %v404 = vmax.f32 %v212, %v369
  %v405 = vmax.f32 %v216, %v373
  %v406 = vmax.f32 %v218, %v375
  %v407 = vmax.f32 %v222, %v379
  %v408 = vmax.f32 %v224, %v381
  %v409 = vld [vmem:[%s2] sm:$0x3]
  %v411 = vlaneseq
  %v412 = vshrl.u32 %v411, 7
  %v413 = vsub.s32 0, %v412
  %v414 = vrot.slane %v409, %v413
  %v415 = vlaneseq
  %v416 = vshrl.u32 %v415, 7
  %v417 = vsub.s32 1, %v416
  %v418 = vrot.slane %v409, %v417
  %v421 = vadd.f32 %v383, %v414
  %v422 = vadd.f32 %v384, %v418
  %v423 = vadd.f32 %v385, %v414
  %v424 = vadd.f32 %v386, %v418
  %v425 = vadd.f32 %v387, %v414
  %v426 = vadd.f32 %v388, %v418
  %v427 = vadd.f32 %v389, %v414
  %v428 = vadd.f32 %v390, %v418
  %v429 = vadd.f32 %v391, %v414
  %v430 = vadd.f32 %v392, %v418
  %v431 = vadd.f32 %v393, %v414
  %v432 = vadd.f32 %v394, %v418
  %v433 = vadd.f32 %v395, %v414
  %v434 = vadd.f32 %v396, %v418
  %v435 = vadd.f32 %v397, %v414
  %v436 = vadd.f32 %v398, %v418
  %v437 = vadd.f32 %v399, %v414
  %v438 = vadd.f32 %v400, %v418
  %v439 = vadd.f32 %v401, %v414
  %v440 = vadd.f32 %v402, %v418
  %v441 = vadd.f32 %v403, %v414
  %v442 = vadd.f32 %v404, %v418
  %v443 = vadd.f32 %v405, %v414
  %v444 = vadd.f32 %v406, %v418
  %v445 = vadd.f32 %v407, %v414
  %v446 = vadd.f32 %v408, %v418
  %v447 = vmax.f32 %v421, 0.0
  %v448 = vmax.f32 %v422, 0.0
  %v449 = vmax.f32 %v423, 0.0
  %v450 = vmax.f32 %v424, 0.0
  %v451 = vmax.f32 %v425, 0.0
  %v452 = vmax.f32 %v426, 0.0
  %v453 = vmax.f32 %v427, 0.0
  %v454 = vmax.f32 %v428, 0.0
  %v455 = vmax.f32 %v429, 0.0
  %v456 = vmax.f32 %v430, 0.0
  %v457 = vmax.f32 %v431, 0.0
  %v458 = vmax.f32 %v432, 0.0
  %v459 = vmax.f32 %v433, 0.0
  %v460 = vmax.f32 %v434, 0.0
  %v461 = vmax.f32 %v435, 0.0
  %v462 = vmax.f32 %v436, 0.0
  %v463 = vmax.f32 %v437, 0.0
  %v464 = vmax.f32 %v438, 0.0
  %v465 = vmax.f32 %v439, 0.0
  %v466 = vmax.f32 %v440, 0.0
  %v467 = vmax.f32 %v441, 0.0
  %v468 = vmax.f32 %v442, 0.0
  %v469 = vmax.f32 %v443, 0.0
  %v470 = vmax.f32 %v444, 0.0
  %v471 = vmax.f32 %v445, 0.0
  %v472 = vmax.f32 %v446, 0.0
  %v473 = vmax.f32 %v447, %v448
  %v474 = vmax.f32 %v449, %v450
  %v475 = vmax.f32 %v451, %v452
  %v476 = vmax.f32 %v453, %v454
  %v477 = vmax.f32 %v455, %v456
  %v478 = vmax.f32 %v457, %v458
  %v479 = vmax.f32 %v459, %v460
  %v480 = vmax.f32 %v461, %v462
  %v481 = vmax.f32 %v463, %v464
  %v482 = vmax.f32 %v465, %v466
  %v483 = vmax.f32 %v467, %v468
  %v484 = vmax.f32 %v469, %v470
  %v485 = vmax.f32 %v471, %v472
  %v486 = vld [vmem:[%s3] sm:$0xff]
  %v487 = vld [vmem:[%s3 + $0x8] sm:$0xff]
  %v488 = vld [vmem:[%s3 + $0x10] sm:$0xff]
  %v489 = vld [vmem:[%s3 + $0x18] sm:$0xff]
  %v490 = vld [vmem:[%s3 + $0x20] sm:$0xff]
  %v491 = vld [vmem:[%s3 + $0x28] sm:$0xff]
  %v492 = vld [vmem:[%s3 + $0x30] sm:$0xff]
  %v493 = vld [vmem:[%s3 + $0x38] sm:$0xff]
  %v494 = vld [vmem:[%s3 + $0x40] sm:$0xff]
  %v495 = vld [vmem:[%s3 + $0x48] sm:$0xff]
  %v496 = vld [vmem:[%s3 + $0x50] sm:$0xff]
  %v497 = vld [vmem:[%s3 + $0x58] sm:$0xff]
  %v498 = vld [vmem:[%s3 + $0x60] sm:$0xff]
  %v499 = vld [vmem:[%s3 + $0x68] sm:$0xff]
  %v500 = vld [vmem:[%s3 + $0x70] sm:$0xff]
  %v501 = vld [vmem:[%s3 + $0x78] sm:$0xff]
  %s502 = scalar_lea.vmem %s3, 128
  %v503 = vld [vmem:[%s502] sm:$0xff]
  %v504 = vld [vmem:[%s502 + $0x8] sm:$0xff]
  %v505 = vld [vmem:[%s502 + $0x10] sm:$0xff]
  %v506 = vld [vmem:[%s502 + $0x18] sm:$0xff]
  %v507 = vld [vmem:[%s502 + $0x20] sm:$0xff]
  %v508 = vld [vmem:[%s502 + $0x28] sm:$0xff]
  %v509 = vld [vmem:[%s502 + $0x30] sm:$0xff]
  %v510 = vld [vmem:[%s502 + $0x38] sm:$0xff]
  %v511 = vld [vmem:[%s502 + $0x40] sm:$0xff]
  %v512 = vld [vmem:[%s502 + $0x48] sm:$0xff]
  %v513 = vld [vmem:[%s502 + $0x50] sm:$0xff]
  %v514 = vld [vmem:[%s502 + $0x58] sm:$0xff]
  %v515 = vld [vmem:[%s502 + $0x60] sm:$0xff]
  %v516 = vld [vmem:[%s502 + $0x68] sm:$0xff]
  %v517 = vld [vmem:[%s502 + $0x70] sm:$0xff]
  %v518 = vld [vmem:[%s502 + $0x78] sm:$0xff]
  %vm533 = vcmask 1046528
  %v534 = vrot.slane %v473, 1
  %v535 = vrot.slane %v474, 1
  %v536 = vsel %vm533, %v534, %v535
  %v537 = vrot.slane %v475, 1
  %v538 = vsel %vm533, %v535, %v537
  %v539 = vrot.slane %v476, 1
  %v540 = vsel %vm533, %v537, %v539
  %v541 = vrot.slane %v477, 1
  %v542 = vsel %vm533, %v539, %v541
  %v543 = vrot.slane %v478, 1
  %v544 = vsel %vm533, %v541, %v543
  %v545 = vrot.slane %v479, 1
  %v546 = vsel %vm533, %v543, %v545
  %v547 = vrot.slane %v480, 1
  %v548 = vsel %vm533, %v545, %v547
  %v549 = vrot.slane %v481, 1
  %v550 = vsel %vm533, %v547, %v549
  %v551 = vrot.slane %v482, 1
  %v552 = vsel %vm533, %v549, %v551
  %v553 = vrot.slane %v483, 1
  %v554 = vsel %vm533, %v551, %v553
  %v555 = vrot.slane %v484, 1
  %v556 = vsel %vm533, %v553, %v555
  %v557 = vrot.slane %v485, 1
  %v558 = vsel %vm533, %v555, %v557
  %v559 = vrot.slane 0.0, 1
  %v560 = vsel %vm533, %v557, %v559
  %574 = vmatprep.subr.mxu0 0.0
  %575 = vmatpush1.msra.mxu0 %v518
  %576 = vmatprep.subr.mxu0 0.0
  %577 = vmatpush1.msra.mxu0 %v517
  %578 = vmatprep.subr.mxu0 0.0
  %579 = vmatpush1.msra.mxu0 %v516
  %580 = vmatprep.subr.mxu0 0.0
  %581 = vmatpush1.msra.mxu0 %v515
  %582 = vmatprep.subr.mxu0 0.0
  %583 = vmatpush1.msra.mxu0 %v514
  %584 = vmatprep.subr.mxu0 0.0
  %585 = vmatpush1.msra.mxu0 %v513
  %586 = vmatprep.subr.mxu0 0.0
  %587 = vmatpush1.msra.mxu0 %v512
  %588 = vmatprep.subr.mxu0 0.0
  %589 = vmatpush1.msra.mxu0 %v511
  %590 = vmatprep.subr.mxu0 0.0
  %591 = vmatpush1.msra.mxu0 %v510
  %592 = vmatprep.subr.mxu0 0.0
  %593 = vmatpush1.msra.mxu0 %v509
  %594 = vmatprep.subr.mxu0 0.0
  %595 = vmatpush1.msra.mxu0 %v508
  %596 = vmatprep.subr.mxu0 0.0
  %597 = vmatpush1.msra.mxu0 %v507
  %598 = vmatprep.subr.mxu0 0.0
  %599 = vmatpush1.msra.mxu0 %v506
  %600 = vmatprep.subr.mxu0 0.0
  %601 = vmatpush1.msra.mxu0 %v505
  %602 = vmatprep.subr.mxu0 0.0
  %603 = vmatpush1.msra.mxu0 %v504
  %604 = vmatprep.subr.mxu0 0.0
  %605 = vmatpush1.msra.mxu0 %v503
  %606 = vmatprep.subr.mxu0 0.0
  %607 = vmatpush2.msra.mxu0 0.0
  %608 = vmatprep.subr.mxu0 0.0
  %609 = vmatpush2.msra.mxu0 0.0
  %610 = vmatprep.subr.mxu0 0.0
  %611 = vmatpush2.msra.mxu0 0.0
  %612 = vmatprep.subr.mxu0 0.0
  %613 = vmatpush2.msra.mxu0 0.0
  %614 = vmatprep.subr.mxu0 0.0
  %615 = vmatpush2.msra.mxu0 0.0
  %616 = vmatprep.subr.mxu0 0.0
  %617 = vmatpush2.msra.mxu0 0.0
  %618 = vmatprep.subr.mxu0 0.0
  %619 = vmatpush2.msra.mxu0 0.0
  %620 = vmatprep.subr.mxu0 0.0
  %621 = vmatpush2.msra.mxu0 0.0
  %622 = vmatprep.subr.mxu0 0.0
  %623 = vmatpush2.msra.mxu0 0.0
  %624 = vmatprep.subr.mxu0 0.0
  %625 = vmatpush2.msra.mxu0 0.0
  %626 = vmatprep.subr.mxu0 0.0
  %627 = vmatpush2.msra.mxu0 0.0
  %628 = vmatprep.subr.mxu0 0.0
  %629 = vmatpush2.msra.mxu0 0.0
  %630 = vmatprep.subr.mxu0 0.0
  %631 = vmatpush2.msra.mxu0 0.0
  %632 = vmatprep.subr.mxu0 0.0
  %633 = vmatpush2.msra.mxu0 0.0
  %634 = vmatprep.subr.mxu0 0.0
  %635 = vmatpush2.msra.mxu0 0.0
  %636 = vmatprep.subr.mxu0 0.0
  %637 = vmatpush2.msra.mxu0 0.0
  %638 = vmatprep.mubr.f32.mxu0 0.0
  %639 = vmatmul.mubr.f32.gmra.mxu0 %v536
  %v640 = vpop.f32.mrf.mxu0
  %v641 = vadd.f32 0.0, %v640
  %v642 = vpop.f32.mrf.mxu0
  %643 = vmatprep.mubr.f32.mxu0 0.0
  %644 = vmatmul.mubr.f32.gmra.mxu0 %v538
  %v645 = vpop.f32.mrf.mxu0
  %v646 = vadd.f32 0.0, %v645
  %v647 = vpop.f32.mrf.mxu0
  %648 = vmatprep.mubr.f32.mxu0 0.0
  %649 = vmatmul.mubr.f32.gmra.mxu0 %v540
  %v650 = vpop.f32.mrf.mxu0
  %v651 = vadd.f32 0.0, %v650
  %v652 = vpop.f32.mrf.mxu0
  %653 = vmatprep.mubr.f32.mxu0 0.0
  %654 = vmatmul.mubr.f32.gmra.mxu0 %v542
  %v655 = vpop.f32.mrf.mxu0
  %v656 = vadd.f32 0.0, %v655
  %v657 = vpop.f32.mrf.mxu0
  %658 = vmatprep.mubr.f32.mxu0 0.0
  %659 = vmatmul.mubr.f32.gmra.mxu0 %v544
  %v660 = vpop.f32.mrf.mxu0
  %v661 = vadd.f32 0.0, %v660
  %v662 = vpop.f32.mrf.mxu0
  %663 = vmatprep.mubr.f32.mxu0 0.0
  %664 = vmatmul.mubr.f32.gmra.mxu0 %v546
  %v665 = vpop.f32.mrf.mxu0
  %v666 = vadd.f32 0.0, %v665
  %v667 = vpop.f32.mrf.mxu0
  %668 = vmatprep.mubr.f32.mxu0 0.0
  %669 = vmatmul.mubr.f32.gmra.mxu0 %v548
  %v670 = vpop.f32.mrf.mxu0
  %v671 = vadd.f32 0.0, %v670
  %v672 = vpop.f32.mrf.mxu0
  %673 = vmatprep.mubr.f32.mxu0 0.0
  %674 = vmatmul.mubr.f32.gmra.mxu0 %v550
  %v675 = vpop.f32.mrf.mxu0
  %v676 = vadd.f32 0.0, %v675
  %v677 = vpop.f32.mrf.mxu0
  %678 = vmatprep.mubr.f32.mxu0 0.0
  %679 = vmatmul.mubr.f32.gmra.mxu0 %v552
  %v680 = vpop.f32.mrf.mxu0
  %v681 = vadd.f32 0.0, %v680
  %v682 = vpop.f32.mrf.mxu0
  %683 = vmatprep.mubr.f32.mxu0 0.0
  %684 = vmatmul.mubr.f32.gmra.mxu0 %v554
  %v685 = vpop.f32.mrf.mxu0
  %v686 = vadd.f32 0.0, %v685
  %v687 = vpop.f32.mrf.mxu0
  %688 = vmatprep.mubr.f32.mxu0 0.0
  %689 = vmatmul.mubr.f32.gmra.mxu0 %v556
  %v690 = vpop.f32.mrf.mxu0
  %v691 = vadd.f32 0.0, %v690
  %v692 = vpop.f32.mrf.mxu0
  %693 = vmatprep.mubr.f32.mxu0 0.0
  %694 = vmatmul.mubr.f32.gmra.mxu0 %v558
  %v695 = vpop.f32.mrf.mxu0
  %v696 = vadd.f32 0.0, %v695
  %v697 = vpop.f32.mrf.mxu0
  %698 = vmatprep.mubr.f32.mxu0 0.0
  %699 = vmatmul.mubr.f32.gmra.mxu0 %v560
  %v700 = vpop.f32.mrf.mxu0
  %v701 = vadd.f32 0.0, %v700
  %v702 = vpop.f32.mrf.mxu0
  %703 = vdwg.mxu0
  %704 = vmatprep.subr.mxu0 0.0
  %705 = vmatpush1.msra.mxu0 %v501
  %706 = vmatprep.subr.mxu0 0.0
  %707 = vmatpush1.msra.mxu0 %v500
  %708 = vmatprep.subr.mxu0 0.0
  %709 = vmatpush1.msra.mxu0 %v499
  %710 = vmatprep.subr.mxu0 0.0
  %711 = vmatpush1.msra.mxu0 %v498
  %712 = vmatprep.subr.mxu0 0.0
  %713 = vmatpush1.msra.mxu0 %v497
  %714 = vmatprep.subr.mxu0 0.0
  %715 = vmatpush1.msra.mxu0 %v496
  %716 = vmatprep.subr.mxu0 0.0
  %717 = vmatpush1.msra.mxu0 %v495
  %718 = vmatprep.subr.mxu0 0.0
  %719 = vmatpush1.msra.mxu0 %v494
  %720 = vmatprep.subr.mxu0 0.0
  %721 = vmatpush1.msra.mxu0 %v493
  %722 = vmatprep.subr.mxu0 0.0
  %723 = vmatpush1.msra.mxu0 %v492
  %724 = vmatprep.subr.mxu0 0.0
  %725 = vmatpush1.msra.mxu0 %v491
  %726 = vmatprep.subr.mxu0 0.0
  %727 = vmatpush1.msra.mxu0 %v490
  %728 = vmatprep.subr.mxu0 0.0
  %729 = vmatpush1.msra.mxu0 %v489
  %730 = vmatprep.subr.mxu0 0.0
  %731 = vmatpush1.msra.mxu0 %v488
  %732 = vmatprep.subr.mxu0 0.0
  %733 = vmatpush1.msra.mxu0 %v487
  %734 = vmatprep.subr.mxu0 0.0
  %735 = vmatpush1.msra.mxu0 %v486
  %736 = vmatprep.subr.mxu0 0.0
  %737 = vmatpush2.msra.mxu0 0.0
  %738 = vmatprep.subr.mxu0 0.0
  %739 = vmatpush2.msra.mxu0 0.0
  %740 = vmatprep.subr.mxu0 0.0
  %741 = vmatpush2.msra.mxu0 0.0
  %742 = vmatprep.subr.mxu0 0.0
  %743 = vmatpush2.msra.mxu0 0.0
  %744 = vmatprep.subr.mxu0 0.0
  %745 = vmatpush2.msra.mxu0 0.0
  %746 = vmatprep.subr.mxu0 0.0
  %747 = vmatpush2.msra.mxu0 0.0
  %748 = vmatprep.subr.mxu0 0.0
  %749 = vmatpush2.msra.mxu0 0.0
  %750 = vmatprep.subr.mxu0 0.0
  %751 = vmatpush2.msra.mxu0 0.0
  %752 = vmatprep.subr.mxu0 0.0
  %753 = vmatpush2.msra.mxu0 0.0
  %754 = vmatprep.subr.mxu0 0.0
  %755 = vmatpush2.msra.mxu0 0.0
  %756 = vmatprep.subr.mxu0 0.0
  %757 = vmatpush2.msra.mxu0 0.0
  %758 = vmatprep.subr.mxu0 0.0
  %759 = vmatpush2.msra.mxu0 0.0
  %760 = vmatprep.subr.mxu0 0.0
  %761 = vmatpush2.msra.mxu0 0.0
  %762 = vmatprep.subr.mxu0 0.0
  %763 = vmatpush2.msra.mxu0 0.0
  %764 = vmatprep.subr.mxu0 0.0
  %765 = vmatpush2.msra.mxu0 0.0
  %766 = vmatprep.subr.mxu0 0.0
  %767 = vmatpush2.msra.mxu0 0.0
  %768 = vmatprep.mubr.f32.mxu0 0.0
  %769 = vmatmul.mubr.f32.gmra.mxu0 %v473
  %v770 = vpop.f32.mrf.mxu0
  %v771 = vadd.f32 %v641, %v770
  %v772 = vpop.f32.mrf.mxu0
  %773 = vmatprep.mubr.f32.mxu0 0.0
  %774 = vmatmul.mubr.f32.gmra.mxu0 %v474
  %v775 = vpop.f32.mrf.mxu0
  %v776 = vadd.f32 %v646, %v775
  %v777 = vpop.f32.mrf.mxu0
  %778 = vmatprep.mubr.f32.mxu0 0.0
  %779 = vmatmul.mubr.f32.gmra.mxu0 %v475
  %v780 = vpop.f32.mrf.mxu0
  %v781 = vadd.f32 %v651, %v780
  %v782 = vpop.f32.mrf.mxu0
  %783 = vmatprep.mubr.f32.mxu0 0.0
  %784 = vmatmul.mubr.f32.gmra.mxu0 %v476
  %v785 = vpop.f32.mrf.mxu0
  %v786 = vadd.f32 %v656, %v785
  %v787 = vpop.f32.mrf.mxu0
  %788 = vmatprep.mubr.f32.mxu0 0.0
  %789 = vmatmul.mubr.f32.gmra.mxu0 %v477
  %v790 = vpop.f32.mrf.mxu0
  %v791 = vadd.f32 %v661, %v790
  %v792 = vpop.f32.mrf.mxu0
  %793 = vmatprep.mubr.f32.mxu0 0.0
  %794 = vmatmul.mubr.f32.gmra.mxu0 %v478
  %v795 = vpop.f32.mrf.mxu0
  %v796 = vadd.f32 %v666, %v795
  %v797 = vpop.f32.mrf.mxu0
  %798 = vmatprep.mubr.f32.mxu0 0.0
  %799 = vmatmul.mubr.f32.gmra.mxu0 %v479
  %v800 = vpop.f32.mrf.mxu0
  %v801 = vadd.f32 %v671, %v800
  %v802 = vpop.f32.mrf.mxu0
  %803 = vmatprep.mubr.f32.mxu0 0.0
  %804 = vmatmul.mubr.f32.gmra.mxu0 %v480
  %v805 = vpop.f32.mrf.mxu0
  %v806 = vadd.f32 %v676, %v805
  %v807 = vpop.f32.mrf.mxu0
  %808 = vmatprep.mubr.f32.mxu0 0.0
  %809 = vmatmul.mubr.f32.gmra.mxu0 %v481
  %v810 = vpop.f32.mrf.mxu0
  %v811 = vadd.f32 %v681, %v810
  %v812 = vpop.f32.mrf.mxu0
  %813 = vmatprep.mubr.f32.mxu0 0.0
  %814 = vmatmul.mubr.f32.gmra.mxu0 %v482
  %v815 = vpop.f32.mrf.mxu0
  %v816 = vadd.f32 %v686, %v815
  %v817 = vpop.f32.mrf.mxu0
  %818 = vmatprep.mubr.f32.mxu0 0.0
  %819 = vmatmul.mubr.f32.gmra.mxu0 %v483
  %v820 = vpop.f32.mrf.mxu0
  %v821 = vadd.f32 %v691, %v820
  %v822 = vpop.f32.mrf.mxu0
  %823 = vmatprep.mubr.f32.mxu0 0.0
  %824 = vmatmul.mubr.f32.gmra.mxu0 %v484
  %v825 = vpop.f32.mrf.mxu0
  %v826 = vadd.f32 %v696, %v825
  %v827 = vpop.f32.mrf.mxu0
  %828 = vmatprep.mubr.f32.mxu0 0.0
  %829 = vmatmul.mubr.f32.gmra.mxu0 %v485
  %v830 = vpop.f32.mrf.mxu0
  %v831 = vadd.f32 %v701, %v830
  %v832 = vpop.f32.mrf.mxu0
  %833 = vdwg.mxu0
  %s834 = scalar_lea.vmem %s3, 256
  %v835 = vld [vmem:[%s834] sm:$0xff]
  %v836 = vld [vmem:[%s834 + $0x8] sm:$0xff]
  %v837 = vld [vmem:[%s834 + $0x10] sm:$0xff]
  %v838 = vld [vmem:[%s834 + $0x18] sm:$0xff]
  %v839 = vld [vmem:[%s834 + $0x20] sm:$0xff]
  %v840 = vld [vmem:[%s834 + $0x28] sm:$0xff]
  %v841 = vld [vmem:[%s834 + $0x30] sm:$0xff]
  %v842 = vld [vmem:[%s834 + $0x38] sm:$0xff]
  %v843 = vld [vmem:[%s834 + $0x40] sm:$0xff]
  %v844 = vld [vmem:[%s834 + $0x48] sm:$0xff]
  %v845 = vld [vmem:[%s834 + $0x50] sm:$0xff]
  %v846 = vld [vmem:[%s834 + $0x58] sm:$0xff]
  %v847 = vld [vmem:[%s834 + $0x60] sm:$0xff]
  %v848 = vld [vmem:[%s834 + $0x68] sm:$0xff]
  %v849 = vld [vmem:[%s834 + $0x70] sm:$0xff]
  %v850 = vld [vmem:[%s834 + $0x78] sm:$0xff]
  %vm851 = vcmask 1045504
  %v852 = vrot.slane %v473, 2
  %v853 = vrot.slane %v474, 2
  %v854 = vsel %vm851, %v852, %v853
  %v855 = vrot.slane %v475, 2
  %v856 = vsel %vm851, %v853, %v855
  %v857 = vrot.slane %v476, 2
  %v858 = vsel %vm851, %v855, %v857
  %v859 = vrot.slane %v477, 2
  %v860 = vsel %vm851, %v857, %v859
  %v861 = vrot.slane %v478, 2
  %v862 = vsel %vm851, %v859, %v861
  %v863 = vrot.slane %v479, 2
  %v864 = vsel %vm851, %v861, %v863
  %v865 = vrot.slane %v480, 2
  %v866 = vsel %vm851, %v863, %v865
  %v867 = vrot.slane %v481, 2
  %v868 = vsel %vm851, %v865, %v867
  %v869 = vrot.slane %v482, 2
  %v870 = vsel %vm851, %v867, %v869
  %v871 = vrot.slane %v483, 2
  %v872 = vsel %vm851, %v869, %v871
  %v873 = vrot.slane %v484, 2
  %v874 = vsel %vm851, %v871, %v873
  %v875 = vrot.slane %v485, 2
  %v876 = vsel %vm851, %v873, %v875
  %v877 = vrot.slane 0.0, 2
  %v878 = vsel %vm851, %v875, %v877
  %892 = vmatprep.subr.mxu0 0.0
  %893 = vmatpush1.msra.mxu0 %v850
  %894 = vmatprep.subr.mxu0 0.0
  %895 = vmatpush1.msra.mxu0 %v849
  %896 = vmatprep.subr.mxu0 0.0
  %897 = vmatpush1.msra.mxu0 %v848
  %898 = vmatprep.subr.mxu0 0.0
  %899 = vmatpush1.msra.mxu0 %v847
  %900 = vmatprep.subr.mxu0 0.0
  %901 = vmatpush1.msra.mxu0 %v846
  %902 = vmatprep.subr.mxu0 0.0
  %903 = vmatpush1.msra.mxu0 %v845
  %904 = vmatprep.subr.mxu0 0.0
  %905 = vmatpush1.msra.mxu0 %v844
  %906 = vmatprep.subr.mxu0 0.0
  %907 = vmatpush1.msra.mxu0 %v843
  %908 = vmatprep.subr.mxu0 0.0
  %909 = vmatpush1.msra.mxu0 %v842
  %910 = vmatprep.subr.mxu0 0.0
  %911 = vmatpush1.msra.mxu0 %v841
  %912 = vmatprep.subr.mxu0 0.0
  %913 = vmatpush1.msra.mxu0 %v840
  %914 = vmatprep.subr.mxu0 0.0
  %915 = vmatpush1.msra.mxu0 %v839
  %916 = vmatprep.subr.mxu0 0.0
  %917 = vmatpush1.msra.mxu0 %v838
  %918 = vmatprep.subr.mxu0 0.0
  %919 = vmatpush1.msra.mxu0 %v837
  %920 = vmatprep.subr.mxu0 0.0
  %921 = vmatpush1.msra.mxu0 %v836
  %922 = vmatprep.subr.mxu0 0.0
  %923 = vmatpush1.msra.mxu0 %v835
  %924 = vmatprep.subr.mxu0 0.0
  %925 = vmatpush2.msra.mxu0 0.0
  %926 = vmatprep.subr.mxu0 0.0
  %927 = vmatpush2.msra.mxu0 0.0
  %928 = vmatprep.subr.mxu0 0.0
  %929 = vmatpush2.msra.mxu0 0.0
  %930 = vmatprep.subr.mxu0 0.0
  %931 = vmatpush2.msra.mxu0 0.0
  %932 = vmatprep.subr.mxu0 0.0
  %933 = vmatpush2.msra.mxu0 0.0
  %934 = vmatprep.subr.mxu0 0.0
  %935 = vmatpush2.msra.mxu0 0.0
  %936 = vmatprep.subr.mxu0 0.0
  %937 = vmatpush2.msra.mxu0 0.0
  %938 = vmatprep.subr.mxu0 0.0
  %939 = vmatpush2.msra.mxu0 0.0
  %940 = vmatprep.subr.mxu0 0.0
  %941 = vmatpush2.msra.mxu0 0.0
  %942 = vmatprep.subr.mxu0 0.0
  %943 = vmatpush2.msra.mxu0 0.0
  %944 = vmatprep.subr.mxu0 0.0
  %945 = vmatpush2.msra.mxu0 0.0
  %946 = vmatprep.subr.mxu0 0.0
  %947 = vmatpush2.msra.mxu0 0.0
  %948 = vmatprep.subr.mxu0 0.0
  %949 = vmatpush2.msra.mxu0 0.0
  %950 = vmatprep.subr.mxu0 0.0
  %951 = vmatpush2.msra.mxu0 0.0
  %952 = vmatprep.subr.mxu0 0.0
  %953 = vmatpush2.msra.mxu0 0.0
  %954 = vmatprep.subr.mxu0 0.0
  %955 = vmatpush2.msra.mxu0 0.0
  %956 = vmatprep.mubr.f32.mxu0 0.0
  %957 = vmatmul.mubr.f32.gmra.mxu0 %v854
  %v958 = vpop.f32.mrf.mxu0
  %v959 = vadd.f32 0.0, %v958
  %v960 = vpop.f32.mrf.mxu0
  %961 = vmatprep.mubr.f32.mxu0 0.0
  %962 = vmatmul.mubr.f32.gmra.mxu0 %v856
  %v963 = vpop.f32.mrf.mxu0
  %v964 = vadd.f32 0.0, %v963
  %v965 = vpop.f32.mrf.mxu0
  %966 = vmatprep.mubr.f32.mxu0 0.0
  %967 = vmatmul.mubr.f32.gmra.mxu0 %v858
  %v968 = vpop.f32.mrf.mxu0
  %v969 = vadd.f32 0.0, %v968
  %v970 = vpop.f32.mrf.mxu0
  %971 = vmatprep.mubr.f32.mxu0 0.0
  %972 = vmatmul.mubr.f32.gmra.mxu0 %v860
  %v973 = vpop.f32.mrf.mxu0
  %v974 = vadd.f32 0.0, %v973
  %v975 = vpop.f32.mrf.mxu0
  %976 = vmatprep.mubr.f32.mxu0 0.0
  %977 = vmatmul.mubr.f32.gmra.mxu0 %v862
  %v978 = vpop.f32.mrf.mxu0
  %v979 = vadd.f32 0.0, %v978
  %v980 = vpop.f32.mrf.mxu0
  %981 = vmatprep.mubr.f32.mxu0 0.0
  %982 = vmatmul.mubr.f32.gmra.mxu0 %v864
  %v983 = vpop.f32.mrf.mxu0
  %v984 = vadd.f32 0.0, %v983
  %v985 = vpop.f32.mrf.mxu0
  %986 = vmatprep.mubr.f32.mxu0 0.0
  %987 = vmatmul.mubr.f32.gmra.mxu0 %v866
  %v988 = vpop.f32.mrf.mxu0
  %v989 = vadd.f32 0.0, %v988
  %v990 = vpop.f32.mrf.mxu0
  %991 = vmatprep.mubr.f32.mxu0 0.0
  %992 = vmatmul.mubr.f32.gmra.mxu0 %v868
  %v993 = vpop.f32.mrf.mxu0
  %v994 = vadd.f32 0.0, %v993
  %v995 = vpop.f32.mrf.mxu0
  %996 = vmatprep.mubr.f32.mxu0 0.0
  %997 = vmatmul.mubr.f32.gmra.mxu0 %v870
  %v998 = vpop.f32.mrf.mxu0
  %v999 = vadd.f32 0.0, %v998
  %v1000 = vpop.f32.mrf.mxu0
  %1001 = vmatprep.mubr.f32.mxu0 0.0
  %1002 = vmatmul.mubr.f32.gmra.mxu0 %v872
  %v1003 = vpop.f32.mrf.mxu0
  %v1004 = vadd.f32 0.0, %v1003
  %v1005 = vpop.f32.mrf.mxu0
  %1006 = vmatprep.mubr.f32.mxu0 0.0
  %1007 = vmatmul.mubr.f32.gmra.mxu0 %v874
  %v1008 = vpop.f32.mrf.mxu0
  %v1009 = vadd.f32 0.0, %v1008
  %v1010 = vpop.f32.mrf.mxu0
  %1011 = vmatprep.mubr.f32.mxu0 0.0
  %1012 = vmatmul.mubr.f32.gmra.mxu0 %v876
  %v1013 = vpop.f32.mrf.mxu0
  %v1014 = vadd.f32 0.0, %v1013
  %v1015 = vpop.f32.mrf.mxu0
  %1016 = vmatprep.mubr.f32.mxu0 0.0
  %1017 = vmatmul.mubr.f32.gmra.mxu0 %v878
  %v1018 = vpop.f32.mrf.mxu0
  %v1019 = vadd.f32 0.0, %v1018
  %v1020 = vpop.f32.mrf.mxu0
  %1021 = vdwg.mxu0
  %v1022 = vadd.f32 %v771, %v959
  %v1023 = vadd.f32 %v776, %v964
  %v1024 = vadd.f32 %v781, %v969
  %v1025 = vadd.f32 %v786, %v974
  %v1026 = vadd.f32 %v791, %v979
  %v1027 = vadd.f32 %v796, %v984
  %v1028 = vadd.f32 %v801, %v989
  %v1029 = vadd.f32 %v806, %v994
  %v1030 = vadd.f32 %v811, %v999
  %v1031 = vadd.f32 %v816, %v1004
  %v1032 = vadd.f32 %v821, %v1009
  %v1033 = vadd.f32 %v826, %v1014
  %v1034 = vadd.f32 %v831, %v1019
  %s1035 = scalar_lea.vmem %s3, 384
  %v1036 = vld [vmem:[%s1035] sm:$0xff]
  %v1037 = vld [vmem:[%s1035 + $0x8] sm:$0xff]
  %v1038 = vld [vmem:[%s1035 + $0x10] sm:$0xff]
  %v1039 = vld [vmem:[%s1035 + $0x18] sm:$0xff]
  %v1040 = vld [vmem:[%s1035 + $0x20] sm:$0xff]
  %v1041 = vld [vmem:[%s1035 + $0x28] sm:$0xff]
  %v1042 = vld [vmem:[%s1035 + $0x30] sm:$0xff]
  %v1043 = vld [vmem:[%s1035 + $0x38] sm:$0xff]
  %v1044 = vld [vmem:[%s1035 + $0x40] sm:$0xff]
  %v1045 = vld [vmem:[%s1035 + $0x48] sm:$0xff]
  %v1046 = vld [vmem:[%s1035 + $0x50] sm:$0xff]
  %v1047 = vld [vmem:[%s1035 + $0x58] sm:$0xff]
  %v1048 = vld [vmem:[%s1035 + $0x60] sm:$0xff]
  %v1049 = vld [vmem:[%s1035 + $0x68] sm:$0xff]
  %v1050 = vld [vmem:[%s1035 + $0x70] sm:$0xff]
  %v1051 = vld [vmem:[%s1035 + $0x78] sm:$0xff]
  %vm1052 = vcmask 1044480
  %v1053 = vrot.slane %v473, 3
  %v1054 = vrot.slane %v474, 3
  %v1055 = vsel %vm1052, %v1053, %v1054
  %v1056 = vrot.slane %v475, 3
  %v1057 = vsel %vm1052, %v1054, %v1056
  %v1058 = vrot.slane %v476, 3
  %v1059 = vsel %vm1052, %v1056, %v1058
  %v1060 = vrot.slane %v477, 3
  %v1061 = vsel %vm1052, %v1058, %v1060
  %v1062 = vrot.slane %v478, 3
  %v1063 = vsel %vm1052, %v1060, %v1062
  %v1064 = vrot.slane %v479, 3
  %v1065 = vsel %vm1052, %v1062, %v1064
  %v1066 = vrot.slane %v480, 3
  %v1067 = vsel %vm1052, %v1064, %v1066
  %v1068 = vrot.slane %v481, 3
  %v1069 = vsel %vm1052, %v1066, %v1068
  %v1070 = vrot.slane %v482, 3
  %v1071 = vsel %vm1052, %v1068, %v1070
  %v1072 = vrot.slane %v483, 3
  %v1073 = vsel %vm1052, %v1070, %v1072
  %v1074 = vrot.slane %v484, 3
  %v1075 = vsel %vm1052, %v1072, %v1074
  %v1076 = vrot.slane %v485, 3
  %v1077 = vsel %vm1052, %v1074, %v1076
  %v1078 = vrot.slane 0.0, 3
  %v1079 = vsel %vm1052, %v1076, %v1078
  %1093 = vmatprep.subr.mxu0 0.0
  %1094 = vmatpush1.msra.mxu0 %v1051
  %1095 = vmatprep.subr.mxu0 0.0
  %1096 = vmatpush1.msra.mxu0 %v1050
  %1097 = vmatprep.subr.mxu0 0.0
  %1098 = vmatpush1.msra.mxu0 %v1049
  %1099 = vmatprep.subr.mxu0 0.0
  %1100 = vmatpush1.msra.mxu0 %v1048
  %1101 = vmatprep.subr.mxu0 0.0
  %1102 = vmatpush1.msra.mxu0 %v1047
  %1103 = vmatprep.subr.mxu0 0.0
  %1104 = vmatpush1.msra.mxu0 %v1046
  %1105 = vmatprep.subr.mxu0 0.0
  %1106 = vmatpush1.msra.mxu0 %v1045
  %1107 = vmatprep.subr.mxu0 0.0
  %1108 = vmatpush1.msra.mxu0 %v1044
  %1109 = vmatprep.subr.mxu0 0.0
  %1110 = vmatpush1.msra.mxu0 %v1043
  %1111 = vmatprep.subr.mxu0 0.0
  %1112 = vmatpush1.msra.mxu0 %v1042
  %1113 = vmatprep.subr.mxu0 0.0
  %1114 = vmatpush1.msra.mxu0 %v1041
  %1115 = vmatprep.subr.mxu0 0.0
  %1116 = vmatpush1.msra.mxu0 %v1040
  %1117 = vmatprep.subr.mxu0 0.0
  %1118 = vmatpush1.msra.mxu0 %v1039
  %1119 = vmatprep.subr.mxu0 0.0
  %1120 = vmatpush1.msra.mxu0 %v1038
  %1121 = vmatprep.subr.mxu0 0.0
  %1122 = vmatpush1.msra.mxu0 %v1037
  %1123 = vmatprep.subr.mxu0 0.0
  %1124 = vmatpush1.msra.mxu0 %v1036
  %1125 = vmatprep.subr.mxu0 0.0
  %1126 = vmatpush2.msra.mxu0 0.0
  %1127 = vmatprep.subr.mxu0 0.0
  %1128 = vmatpush2.msra.mxu0 0.0
  %1129 = vmatprep.subr.mxu0 0.0
  %1130 = vmatpush2.msra.mxu0 0.0
  %1131 = vmatprep.subr.mxu0 0.0
  %1132 = vmatpush2.msra.mxu0 0.0
  %1133 = vmatprep.subr.mxu0 0.0
  %1134 = vmatpush2.msra.mxu0 0.0
  %1135 = vmatprep.subr.mxu0 0.0
  %1136 = vmatpush2.msra.mxu0 0.0
  %1137 = vmatprep.subr.mxu0 0.0
  %1138 = vmatpush2.msra.mxu0 0.0
  %1139 = vmatprep.subr.mxu0 0.0
  %1140 = vmatpush2.msra.mxu0 0.0
  %1141 = vmatprep.subr.mxu0 0.0
  %1142 = vmatpush2.msra.mxu0 0.0
  %1143 = vmatprep.subr.mxu0 0.0
  %1144 = vmatpush2.msra.mxu0 0.0
  %1145 = vmatprep.subr.mxu0 0.0
  %1146 = vmatpush2.msra.mxu0 0.0
  %1147 = vmatprep.subr.mxu0 0.0
  %1148 = vmatpush2.msra.mxu0 0.0
  %1149 = vmatprep.subr.mxu0 0.0
  %1150 = vmatpush2.msra.mxu0 0.0
  %1151 = vmatprep.subr.mxu0 0.0
  %1152 = vmatpush2.msra.mxu0 0.0
  %1153 = vmatprep.subr.mxu0 0.0
  %1154 = vmatpush2.msra.mxu0 0.0
  %1155 = vmatprep.subr.mxu0 0.0
  %1156 = vmatpush2.msra.mxu0 0.0
  %1157 = vmatprep.mubr.f32.mxu0 0.0
  %1158 = vmatmul.mubr.f32.gmra.mxu0 %v1055
  %v1159 = vpop.f32.mrf.mxu0
  %v1160 = vadd.f32 0.0, %v1159
  %v1161 = vpop.f32.mrf.mxu0
  %1162 = vmatprep.mubr.f32.mxu0 0.0
  %1163 = vmatmul.mubr.f32.gmra.mxu0 %v1057
  %v1164 = vpop.f32.mrf.mxu0
  %v1165 = vadd.f32 0.0, %v1164
  %v1166 = vpop.f32.mrf.mxu0
  %1167 = vmatprep.mubr.f32.mxu0 0.0
  %1168 = vmatmul.mubr.f32.gmra.mxu0 %v1059
  %v1169 = vpop.f32.mrf.mxu0
  %v1170 = vadd.f32 0.0, %v1169
  %v1171 = vpop.f32.mrf.mxu0
  %1172 = vmatprep.mubr.f32.mxu0 0.0
  %1173 = vmatmul.mubr.f32.gmra.mxu0 %v1061
  %v1174 = vpop.f32.mrf.mxu0
  %v1175 = vadd.f32 0.0, %v1174
  %v1176 = vpop.f32.mrf.mxu0
  %1177 = vmatprep.mubr.f32.mxu0 0.0
  %1178 = vmatmul.mubr.f32.gmra.mxu0 %v1063
  %v1179 = vpop.f32.mrf.mxu0
  %v1180 = vadd.f32 0.0, %v1179
  %v1181 = vpop.f32.mrf.mxu0
  %1182 = vmatprep.mubr.f32.mxu0 0.0
  %1183 = vmatmul.mubr.f32.gmra.mxu0 %v1065
  %v1184 = vpop.f32.mrf.mxu0
  %v1185 = vadd.f32 0.0, %v1184
  %v1186 = vpop.f32.mrf.mxu0
  %1187 = vmatprep.mubr.f32.mxu0 0.0
  %1188 = vmatmul.mubr.f32.gmra.mxu0 %v1067
  %v1189 = vpop.f32.mrf.mxu0
  %v1190 = vadd.f32 0.0, %v1189
  %v1191 = vpop.f32.mrf.mxu0
  %1192 = vmatprep.mubr.f32.mxu0 0.0
  %1193 = vmatmul.mubr.f32.gmra.mxu0 %v1069
  %v1194 = vpop.f32.mrf.mxu0
  %v1195 = vadd.f32 0.0, %v1194
  %v1196 = vpop.f32.mrf.mxu0
  %1197 = vmatprep.mubr.f32.mxu0 0.0
  %1198 = vmatmul.mubr.f32.gmra.mxu0 %v1071
  %v1199 = vpop.f32.mrf.mxu0
  %v1200 = vadd.f32 0.0, %v1199
  %v1201 = vpop.f32.mrf.mxu0
  %1202 = vmatprep.mubr.f32.mxu0 0.0
  %1203 = vmatmul.mubr.f32.gmra.mxu0 %v1073
  %v1204 = vpop.f32.mrf.mxu0
  %v1205 = vadd.f32 0.0, %v1204
  %v1206 = vpop.f32.mrf.mxu0
  %1207 = vmatprep.mubr.f32.mxu0 0.0
  %1208 = vmatmul.mubr.f32.gmra.mxu0 %v1075
  %v1209 = vpop.f32.mrf.mxu0
  %v1210 = vadd.f32 0.0, %v1209
  %v1211 = vpop.f32.mrf.mxu0
  %1212 = vmatprep.mubr.f32.mxu0 0.0
  %1213 = vmatmul.mubr.f32.gmra.mxu0 %v1077
  %v1214 = vpop.f32.mrf.mxu0
  %v1215 = vadd.f32 0.0, %v1214
  %v1216 = vpop.f32.mrf.mxu0
  %1217 = vmatprep.mubr.f32.mxu0 0.0
  %1218 = vmatmul.mubr.f32.gmra.mxu0 %v1079
  %v1219 = vpop.f32.mrf.mxu0
  %v1220 = vadd.f32 0.0, %v1219
  %v1221 = vpop.f32.mrf.mxu0
  %1222 = vdwg.mxu0
  %v1223 = vadd.f32 %v1022, %v1160
  %v1224 = vadd.f32 %v1023, %v1165
  %v1225 = vadd.f32 %v1024, %v1170
  %v1226 = vadd.f32 %v1025, %v1175
  %v1227 = vadd.f32 %v1026, %v1180
  %v1228 = vadd.f32 %v1027, %v1185
  %v1229 = vadd.f32 %v1028, %v1190
  %v1230 = vadd.f32 %v1029, %v1195
  %v1231 = vadd.f32 %v1030, %v1200
  %v1232 = vadd.f32 %v1031, %v1205
  %v1233 = vadd.f32 %v1032, %v1210
  %v1234 = vadd.f32 %v1033, %v1215
  %v1235 = vadd.f32 %v1034, %v1220
  %s1236 = scalar_lea.vmem %s3, 512
  %v1237 = vld [vmem:[%s1236] sm:$0xff]
  %v1238 = vld [vmem:[%s1236 + $0x8] sm:$0xff]
  %v1239 = vld [vmem:[%s1236 + $0x10] sm:$0xff]
  %v1240 = vld [vmem:[%s1236 + $0x18] sm:$0xff]
  %v1241 = vld [vmem:[%s1236 + $0x20] sm:$0xff]
  %v1242 = vld [vmem:[%s1236 + $0x28] sm:$0xff]
  %v1243 = vld [vmem:[%s1236 + $0x30] sm:$0xff]
  %v1244 = vld [vmem:[%s1236 + $0x38] sm:$0xff]
  %v1245 = vld [vmem:[%s1236 + $0x40] sm:$0xff]
  %v1246 = vld [vmem:[%s1236 + $0x48] sm:$0xff]
  %v1247 = vld [vmem:[%s1236 + $0x50] sm:$0xff]
  %v1248 = vld [vmem:[%s1236 + $0x58] sm:$0xff]
  %v1249 = vld [vmem:[%s1236 + $0x60] sm:$0xff]
  %v1250 = vld [vmem:[%s1236 + $0x68] sm:$0xff]
  %v1251 = vld [vmem:[%s1236 + $0x70] sm:$0xff]
  %v1252 = vld [vmem:[%s1236 + $0x78] sm:$0xff]
  %vm1253 = vcmask 1043456
  %v1254 = vrot.slane %v473, 4
  %v1255 = vrot.slane %v474, 4
  %v1256 = vsel %vm1253, %v1254, %v1255
  %v1257 = vrot.slane %v475, 4
  %v1258 = vsel %vm1253, %v1255, %v1257
  %v1259 = vrot.slane %v476, 4
  %v1260 = vsel %vm1253, %v1257, %v1259
  %v1261 = vrot.slane %v477, 4
  %v1262 = vsel %vm1253, %v1259, %v1261
  %v1263 = vrot.slane %v478, 4
  %v1264 = vsel %vm1253, %v1261, %v1263
  %v1265 = vrot.slane %v479, 4
  %v1266 = vsel %vm1253, %v1263, %v1265
  %v1267 = vrot.slane %v480, 4
  %v1268 = vsel %vm1253, %v1265, %v1267
  %v1269 = vrot.slane %v481, 4
  %v1270 = vsel %vm1253, %v1267, %v1269
  %v1271 = vrot.slane %v482, 4
  %v1272 = vsel %vm1253, %v1269, %v1271
  %v1273 = vrot.slane %v483, 4
  %v1274 = vsel %vm1253, %v1271, %v1273
  %v1275 = vrot.slane %v484, 4
  %v1276 = vsel %vm1253, %v1273, %v1275
  %v1277 = vrot.slane %v485, 4
  %v1278 = vsel %vm1253, %v1275, %v1277
  %v1279 = vrot.slane 0.0, 4
  %v1280 = vsel %vm1253, %v1277, %v1279
  %1294 = vmatprep.subr.mxu0 0.0
  %1295 = vmatpush1.msra.mxu0 %v1252
  %1296 = vmatprep.subr.mxu0 0.0
  %1297 = vmatpush1.msra.mxu0 %v1251
  %1298 = vmatprep.subr.mxu0 0.0
  %1299 = vmatpush1.msra.mxu0 %v1250
  %1300 = vmatprep.subr.mxu0 0.0
  %1301 = vmatpush1.msra.mxu0 %v1249
  %1302 = vmatprep.subr.mxu0 0.0
  %1303 = vmatpush1.msra.mxu0 %v1248
  %1304 = vmatprep.subr.mxu0 0.0
  %1305 = vmatpush1.msra.mxu0 %v1247
  %1306 = vmatprep.subr.mxu0 0.0
  %1307 = vmatpush1.msra.mxu0 %v1246
  %1308 = vmatprep.subr.mxu0 0.0
  %1309 = vmatpush1.msra.mxu0 %v1245
  %1310 = vmatprep.subr.mxu0 0.0
  %1311 = vmatpush1.msra.mxu0 %v1244
  %1312 = vmatprep.subr.mxu0 0.0
  %1313 = vmatpush1.msra.mxu0 %v1243
  %1314 = vmatprep.subr.mxu0 0.0
  %1315 = vmatpush1.msra.mxu0 %v1242
  %1316 = vmatprep.subr.mxu0 0.0
  %1317 = vmatpush1.msra.mxu0 %v1241
  %1318 = vmatprep.subr.mxu0 0.0
  %1319 = vmatpush1.msra.mxu0 %v1240
  %1320 = vmatprep.subr.mxu0 0.0
  %1321 = vmatpush1.msra.mxu0 %v1239
  %1322 = vmatprep.subr.mxu0 0.0
  %1323 = vmatpush1.msra.mxu0 %v1238
  %1324 = vmatprep.subr.mxu0 0.0
  %1325 = vmatpush1.msra.mxu0 %v1237
  %1326 = vmatprep.subr.mxu0 0.0
  %1327 = vmatpush2.msra.mxu0 0.0
  %1328 = vmatprep.subr.mxu0 0.0
  %1329 = vmatpush2.msra.mxu0 0.0
  %1330 = vmatprep.subr.mxu0 0.0
  %1331 = vmatpush2.msra.mxu0 0.0
  %1332 = vmatprep.subr.mxu0 0.0
  %1333 = vmatpush2.msra.mxu0 0.0
  %1334 = vmatprep.subr.mxu0 0.0
  %1335 = vmatpush2.msra.mxu0 0.0
  %1336 = vmatprep.subr.mxu0 0.0
  %1337 = vmatpush2.msra.mxu0 0.0
  %1338 = vmatprep.subr.mxu0 0.0
  %1339 = vmatpush2.msra.mxu0 0.0
  %1340 = vmatprep.subr.mxu0 0.0
  %1341 = vmatpush2.msra.mxu0 0.0
  %1342 = vmatprep.subr.mxu0 0.0
  %1343 = vmatpush2.msra.mxu0 0.0
  %1344 = vmatprep.subr.mxu0 0.0
  %1345 = vmatpush2.msra.mxu0 0.0
  %1346 = vmatprep.subr.mxu0 0.0
  %1347 = vmatpush2.msra.mxu0 0.0
  %1348 = vmatprep.subr.mxu0 0.0
  %1349 = vmatpush2.msra.mxu0 0.0
  %1350 = vmatprep.subr.mxu0 0.0
  %1351 = vmatpush2.msra.mxu0 0.0
  %1352 = vmatprep.subr.mxu0 0.0
  %1353 = vmatpush2.msra.mxu0 0.0
  %1354 = vmatprep.subr.mxu0 0.0
  %1355 = vmatpush2.msra.mxu0 0.0
  %1356 = vmatprep.subr.mxu0 0.0
  %1357 = vmatpush2.msra.mxu0 0.0
  %1358 = vmatprep.mubr.f32.mxu0 0.0
  %1359 = vmatmul.mubr.f32.gmra.mxu0 %v1256
  %v1360 = vpop.f32.mrf.mxu0
  %v1361 = vadd.f32 0.0, %v1360
  %v1362 = vpop.f32.mrf.mxu0
  %1363 = vmatprep.mubr.f32.mxu0 0.0
  %1364 = vmatmul.mubr.f32.gmra.mxu0 %v1258
  %v1365 = vpop.f32.mrf.mxu0
  %v1366 = vadd.f32 0.0, %v1365
  %v1367 = vpop.f32.mrf.mxu0
  %1368 = vmatprep.mubr.f32.mxu0 0.0
  %1369 = vmatmul.mubr.f32.gmra.mxu0 %v1260
  %v1370 = vpop.f32.mrf.mxu0
  %v1371 = vadd.f32 0.0, %v1370
  %v1372 = vpop.f32.mrf.mxu0
  %1373 = vmatprep.mubr.f32.mxu0 0.0
  %1374 = vmatmul.mubr.f32.gmra.mxu0 %v1262
  %v1375 = vpop.f32.mrf.mxu0
  %v1376 = vadd.f32 0.0, %v1375
  %v1377 = vpop.f32.mrf.mxu0
  %1378 = vmatprep.mubr.f32.mxu0 0.0
  %1379 = vmatmul.mubr.f32.gmra.mxu0 %v1264
  %v1380 = vpop.f32.mrf.mxu0
  %v1381 = vadd.f32 0.0, %v1380
  %v1382 = vpop.f32.mrf.mxu0
  %1383 = vmatprep.mubr.f32.mxu0 0.0
  %1384 = vmatmul.mubr.f32.gmra.mxu0 %v1266
  %v1385 = vpop.f32.mrf.mxu0
  %v1386 = vadd.f32 0.0, %v1385
  %v1387 = vpop.f32.mrf.mxu0
  %1388 = vmatprep.mubr.f32.mxu0 0.0
  %1389 = vmatmul.mubr.f32.gmra.mxu0 %v1268
  %v1390 = vpop.f32.mrf.mxu0
  %v1391 = vadd.f32 0.0, %v1390
  %v1392 = vpop.f32.mrf.mxu0
  %1393 = vmatprep.mubr.f32.mxu0 0.0
  %1394 = vmatmul.mubr.f32.gmra.mxu0 %v1270
  %v1395 = vpop.f32.mrf.mxu0
  %v1396 = vadd.f32 0.0, %v1395
  %v1397 = vpop.f32.mrf.mxu0
  %1398 = vmatprep.mubr.f32.mxu0 0.0
  %1399 = vmatmul.mubr.f32.gmra.mxu0 %v1272
  %v1400 = vpop.f32.mrf.mxu0
  %v1401 = vadd.f32 0.0, %v1400
  %v1402 = vpop.f32.mrf.mxu0
  %1403 = vmatprep.mubr.f32.mxu0 0.0
  %1404 = vmatmul.mubr.f32.gmra.mxu0 %v1274
  %v1405 = vpop.f32.mrf.mxu0
  %v1406 = vadd.f32 0.0, %v1405
  %v1407 = vpop.f32.mrf.mxu0
  %1408 = vmatprep.mubr.f32.mxu0 0.0
  %1409 = vmatmul.mubr.f32.gmra.mxu0 %v1276
  %v1410 = vpop.f32.mrf.mxu0
  %v1411 = vadd.f32 0.0, %v1410
  %v1412 = vpop.f32.mrf.mxu0
  %1413 = vmatprep.mubr.f32.mxu0 0.0
  %1414 = vmatmul.mubr.f32.gmra.mxu0 %v1278
  %v1415 = vpop.f32.mrf.mxu0
  %v1416 = vadd.f32 0.0, %v1415
  %v1417 = vpop.f32.mrf.mxu0
  %1418 = vmatprep.mubr.f32.mxu0 0.0
  %1419 = vmatmul.mubr.f32.gmra.mxu0 %v1280
  %v1420 = vpop.f32.mrf.mxu0
  %v1421 = vadd.f32 0.0, %v1420
  %v1422 = vpop.f32.mrf.mxu0
  %1423 = vdwg.mxu0
  %v1424 = vadd.f32 %v1223, %v1361
  %v1425 = vadd.f32 %v1224, %v1366
  %v1426 = vadd.f32 %v1225, %v1371
  %v1427 = vadd.f32 %v1226, %v1376
  %v1428 = vadd.f32 %v1227, %v1381
  %v1429 = vadd.f32 %v1228, %v1386
  %v1430 = vadd.f32 %v1229, %v1391
  %v1431 = vadd.f32 %v1230, %v1396
  %v1432 = vadd.f32 %v1231, %v1401
  %v1433 = vadd.f32 %v1232, %v1406
  %v1434 = vadd.f32 %v1233, %v1411
  %v1435 = vadd.f32 %v1234, %v1416
  %v1436 = vadd.f32 %v1235, %v1421
  %v1437 = vld [vmem:[%s4] sm:$0x1]
  %v1439 = vlaneseq
  %v1440 = vshrl.u32 %v1439, 7
  %v1441 = vsub.s32 0, %v1440
  %v1442 = vrot.slane %v1437, %v1441
  %v1444 = vadd.f32 %v1424, %v1442
  %v1445 = vadd.f32 %v1425, %v1442
  %v1446 = vadd.f32 %v1426, %v1442
  %v1447 = vadd.f32 %v1427, %v1442
  %v1448 = vadd.f32 %v1428, %v1442
  %v1449 = vadd.f32 %v1429, %v1442
  %v1450 = vadd.f32 %v1430, %v1442
  %v1451 = vadd.f32 %v1431, %v1442
  %v1452 = vadd.f32 %v1432, %v1442
  %v1453 = vadd.f32 %v1433, %v1442
  %v1454 = vadd.f32 %v1434, %v1442
  %v1455 = vadd.f32 %v1435, %v1442
  %v1456 = vadd.f32 %v1436, %v1442
  %v1457 = vmax.f32 %v1444, 0.0
  %v1458 = vmax.f32 %v1445, 0.0
  %v1459 = vmax.f32 %v1446, 0.0
  %v1460 = vmax.f32 %v1447, 0.0
  %v1461 = vmax.f32 %v1448, 0.0
  %v1462 = vmax.f32 %v1449, 0.0
  %v1463 = vmax.f32 %v1450, 0.0
  %v1464 = vmax.f32 %v1451, 0.0
  %v1465 = vmax.f32 %v1452, 0.0
  %v1466 = vmax.f32 %v1453, 0.0
  %v1467 = vmax.f32 %v1454, 0.0
  %v1468 = vmax.f32 %v1455, 0.0
  %v1469 = vmax.f32 %v1456, 0.0
  %v1470 = vld [vmem:[%s5] sm:$0xff]
  %v1471 = vld [vmem:[%s5 + $0x8] sm:$0xff]
  %v1472 = vld [vmem:[%s5 + $0x10] sm:$0xff]
  %v1473 = vld [vmem:[%s5 + $0x18] sm:$0xff]
  %vm1474 = vcmask 850944
  %v1476 = vsel %vm1474, %v1470, 0
  %v1479 = vsel %vm1474, %v1471, 0
  %v1482 = vsel %vm1474, %v1472, 0
  %v1485 = vsel %vm1474, %v1473, 0
  %1487 = vmatprep.subr.mxu0 0.0
  %1488 = vmatpush1.msra.mxu0 0.0
  %1489 = vmatprep.subr.mxu0 0.0
  %1490 = vmatpush1.msra.mxu0 0.0
  %1491 = vmatprep.subr.mxu0 0.0
  %1492 = vmatpush1.msra.mxu0 0.0
  %1493 = vmatprep.subr.mxu0 0.0
  %1494 = vmatpush1.msra.mxu0 %v1469
  %1495 = vmatprep.subr.mxu0 0.0
  %1496 = vmatpush1.msra.mxu0 %v1468
  %1497 = vmatprep.subr.mxu0 0.0
  %1498 = vmatpush1.msra.mxu0 %v1467
  %1499 = vmatprep.subr.mxu0 0.0
  %1500 = vmatpush1.msra.mxu0 %v1466
  %1501 = vmatprep.subr.mxu0 0.0
  %1502 = vmatpush1.msra.mxu0 %v1465
  %1503 = vmatprep.subr.mxu0 0.0
  %1504 = vmatpush1.msra.mxu0 %v1464
  %1505 = vmatprep.subr.mxu0 0.0
  %1506 = vmatpush1.msra.mxu0 %v1463
  %1507 = vmatprep.subr.mxu0 0.0
  %1508 = vmatpush1.msra.mxu0 %v1462
  %1509 = vmatprep.subr.mxu0 0.0
  %1510 = vmatpush1.msra.mxu0 %v1461
  %1511 = vmatprep.subr.mxu0 0.0
  %1512 = vmatpush1.msra.mxu0 %v1460
  %1513 = vmatprep.subr.mxu0 0.0
  %1514 = vmatpush1.msra.mxu0 %v1459
  %1515 = vmatprep.subr.mxu0 0.0
  %1516 = vmatpush1.msra.mxu0 %v1458
  %1517 = vmatprep.subr.mxu0 0.0
  %1518 = vmatpush1.msra.mxu0 %v1457
  %1519 = vmatprep.subr.mxu0 0.0
  %1520 = vmatpush2.msra.mxu0 0.0
  %1521 = vmatprep.subr.mxu0 0.0
  %1522 = vmatpush2.msra.mxu0 0.0
  %1523 = vmatprep.subr.mxu0 0.0
  %1524 = vmatpush2.msra.mxu0 0.0
  %1525 = vmatprep.subr.mxu0 0.0
  %1526 = vmatpush2.msra.mxu0 0.0
  %1527 = vmatprep.subr.mxu0 0.0
  %1528 = vmatpush2.msra.mxu0 0.0
  %1529 = vmatprep.subr.mxu0 0.0
  %1530 = vmatpush2.msra.mxu0 0.0
  %1531 = vmatprep.subr.mxu0 0.0
  %1532 = vmatpush2.msra.mxu0 0.0
  %1533 = vmatprep.subr.mxu0 0.0
  %1534 = vmatpush2.msra.mxu0 0.0
  %1535 = vmatprep.subr.mxu0 0.0
  %1536 = vmatpush2.msra.mxu0 0.0
  %1537 = vmatprep.subr.mxu0 0.0
  %1538 = vmatpush2.msra.mxu0 0.0
  %1539 = vmatprep.subr.mxu0 0.0
  %1540 = vmatpush2.msra.mxu0 0.0
  %1541 = vmatprep.subr.mxu0 0.0
  %1542 = vmatpush2.msra.mxu0 0.0
  %1543 = vmatprep.subr.mxu0 0.0
  %1544 = vmatpush2.msra.mxu0 0.0
  %1545 = vmatprep.subr.mxu0 0.0
  %1546 = vmatpush2.msra.mxu0 0.0
  %1547 = vmatprep.subr.mxu0 0.0
  %1548 = vmatpush2.msra.mxu0 0.0
  %1549 = vmatprep.subr.mxu0 0.0
  %1550 = vmatpush2.msra.mxu0 0.0
  %1551 = vmatprep.mubr.f32.mxu0 0.0
  %1552 = vmatmul.mubr.f32.gmra.mxu0 %v1476
  %v1553 = vpop.f32.mrf.mxu0
  %v1554 = vadd.f32 0.0, %v1553
  %v1555 = vpop.f32.mrf.mxu0
  %1556 = vmatprep.mubr.f32.mxu0 0.0
  %1557 = vmatmul.mubr.f32.gmra.mxu0 %v1479
  %v1558 = vpop.f32.mrf.mxu0
  %v1559 = vadd.f32 0.0, %v1558
  %v1560 = vpop.f32.mrf.mxu0
  %1561 = vmatprep.mubr.f32.mxu0 0.0
  %1562 = vmatmul.mubr.f32.gmra.mxu0 %v1482
  %v1563 = vpop.f32.mrf.mxu0
  %v1564 = vadd.f32 0.0, %v1563
  %v1565 = vpop.f32.mrf.mxu0
  %1566 = vmatprep.mubr.f32.mxu0 0.0
  %1567 = vmatmul.mubr.f32.gmra.mxu0 %v1485
  %v1568 = vpop.f32.mrf.mxu0
  %v1569 = vadd.f32 0.0, %v1568
  %v1570 = vpop.f32.mrf.mxu0
  %1571 = vdwg.mxu0
  %s1572 = scalar_lea.vmem %s5, 32
  %v1573 = vld [vmem:[%s1572] sm:$0xff]
  %v1574 = vld [vmem:[%s1572 + $0x8] sm:$0xff]
  %v1575 = vld [vmem:[%s1572 + $0x10] sm:$0xff]
  %v1576 = vld [vmem:[%s1572 + $0x18] sm:$0xff]
  %v1578 = vsel %vm1474, %v1573, 0
  %v1581 = vsel %vm1474, %v1574, 0
  %v1584 = vsel %vm1474, %v1575, 0
  %v1587 = vsel %vm1474, %v1576, 0
  %1589 = vmatprep.subr.mxu0 0.0
  %1590 = vmatpush1.msra.mxu0 0.0
  %1591 = vmatprep.subr.mxu0 0.0
  %1592 = vmatpush1.msra.mxu0 0.0
  %1593 = vmatprep.subr.mxu0 0.0
  %1594 = vmatpush1.msra.mxu0 0.0
  %1595 = vmatprep.subr.mxu0 0.0
  %1596 = vmatpush1.msra.mxu0 %v1469
  %1597 = vmatprep.subr.mxu0 0.0
  %1598 = vmatpush1.msra.mxu0 %v1468
  %1599 = vmatprep.subr.mxu0 0.0
  %1600 = vmatpush1.msra.mxu0 %v1467
  %1601 = vmatprep.subr.mxu0 0.0
  %1602 = vmatpush1.msra.mxu0 %v1466
  %1603 = vmatprep.subr.mxu0 0.0
  %1604 = vmatpush1.msra.mxu0 %v1465
  %1605 = vmatprep.subr.mxu0 0.0
  %1606 = vmatpush1.msra.mxu0 %v1464
  %1607 = vmatprep.subr.mxu0 0.0
  %1608 = vmatpush1.msra.mxu0 %v1463
  %1609 = vmatprep.subr.mxu0 0.0
  %1610 = vmatpush1.msra.mxu0 %v1462
  %1611 = vmatprep.subr.mxu0 0.0
  %1612 = vmatpush1.msra.mxu0 %v1461
  %1613 = vmatprep.subr.mxu0 0.0
  %1614 = vmatpush1.msra.mxu0 %v1460
  %1615 = vmatprep.subr.mxu0 0.0
  %1616 = vmatpush1.msra.mxu0 %v1459
  %1617 = vmatprep.subr.mxu0 0.0
  %1618 = vmatpush1.msra.mxu0 %v1458
  %1619 = vmatprep.subr.mxu0 0.0
  %1620 = vmatpush1.msra.mxu0 %v1457
  %1621 = vmatprep.subr.mxu0 0.0
  %1622 = vmatpush2.msra.mxu0 0.0
  %1623 = vmatprep.subr.mxu0 0.0
  %1624 = vmatpush2.msra.mxu0 0.0
  %1625 = vmatprep.subr.mxu0 0.0
  %1626 = vmatpush2.msra.mxu0 0.0
  %1627 = vmatprep.subr.mxu0 0.0
  %1628 = vmatpush2.msra.mxu0 0.0
  %1629 = vmatprep.subr.mxu0 0.0
  %1630 = vmatpush2.msra.mxu0 0.0
  %1631 = vmatprep.subr.mxu0 0.0
  %1632 = vmatpush2.msra.mxu0 0.0
  %1633 = vmatprep.subr.mxu0 0.0
  %1634 = vmatpush2.msra.mxu0 0.0
  %1635 = vmatprep.subr.mxu0 0.0
  %1636 = vmatpush2.msra.mxu0 0.0
  %1637 = vmatprep.subr.mxu0 0.0
  %1638 = vmatpush2.msra.mxu0 0.0
  %1639 = vmatprep.subr.mxu0 0.0
  %1640 = vmatpush2.msra.mxu0 0.0
  %1641 = vmatprep.subr.mxu0 0.0
  %1642 = vmatpush2.msra.mxu0 0.0
  %1643 = vmatprep.subr.mxu0 0.0
  %1644 = vmatpush2.msra.mxu0 0.0
  %1645 = vmatprep.subr.mxu0 0.0
  %1646 = vmatpush2.msra.mxu0 0.0
  %1647 = vmatprep.subr.mxu0 0.0
  %1648 = vmatpush2.msra.mxu0 0.0
  %1649 = vmatprep.subr.mxu0 0.0
  %1650 = vmatpush2.msra.mxu0 0.0
  %1651 = vmatprep.subr.mxu0 0.0
  %1652 = vmatpush2.msra.mxu0 0.0
  %1653 = vmatprep.mubr.f32.mxu0 0.0
  %1654 = vmatmul.mubr.f32.gmra.mxu0 %v1578
  %v1655 = vpop.f32.mrf.mxu0
  %v1656 = vadd.f32 0.0, %v1655
  %v1657 = vpop.f32.mrf.mxu0
  %1658 = vmatprep.mubr.f32.mxu0 0.0
  %1659 = vmatmul.mubr.f32.gmra.mxu0 %v1581
  %v1660 = vpop.f32.mrf.mxu0
  %v1661 = vadd.f32 0.0, %v1660
  %v1662 = vpop.f32.mrf.mxu0
  %1663 = vmatprep.mubr.f32.mxu0 0.0
  %1664 = vmatmul.mubr.f32.gmra.mxu0 %v1584
  %v1665 = vpop.f32.mrf.mxu0
  %v1666 = vadd.f32 0.0, %v1665
  %v1667 = vpop.f32.mrf.mxu0
  %1668 = vmatprep.mubr.f32.mxu0 0.0
  %1669 = vmatmul.mubr.f32.gmra.mxu0 %v1587
  %v1670 = vpop.f32.mrf.mxu0
  %v1671 = vadd.f32 0.0, %v1670
  %v1672 = vpop.f32.mrf.mxu0
  %1673 = vdwg.mxu0
  %v1674 = vmax.f32 %v1554, %v1656
  %v1675 = vmax.f32 %v1559, %v1661
  %v1676 = vmax.f32 %v1564, %v1666
  %v1677 = vmax.f32 %v1569, %v1671
  %v1678 = vld [vmem:[%s6] sm:$0xff]
  %v1679 = vld [vmem:[%s6 + $0x8] sm:$0xff]
  %v1680 = vld [vmem:[%s6 + $0x10] sm:$0xff]
  %v1681 = vld [vmem:[%s6 + $0x18] sm:$0xff]
  %v1682 = vld [vmem:[%s6 + $0x20] sm:$0xff]
  %v1683 = vld [vmem:[%s6 + $0x28] sm:$0xff]
  %v1684 = vld [vmem:[%s6 + $0x30] sm:$0xff]
  %v1685 = vld [vmem:[%s6 + $0x38] sm:$0xff]
  %v1686 = vld [vmem:[%s6 + $0x40] sm:$0xff]
  %v1687 = vld [vmem:[%s6 + $0x48] sm:$0xff]
  %v1688 = vld [vmem:[%s6 + $0x50] sm:$0xff]
  %v1689 = vld [vmem:[%s6 + $0x58] sm:$0xff]
  %v1690 = vld [vmem:[%s6 + $0x60] sm:$0xff]
  %v1691 = vld [vmem:[%s6 + $0x68] sm:$0xff]
  %v1692 = vld [vmem:[%s6 + $0x70] sm:$0xff]
  %v1693 = vld [vmem:[%s6 + $0x78] sm:$0xff]
  %1694 = vmatprep.subr.mxu0 0.0
  %1695 = vmatpush1.msra.mxu0 %v1693
  %1696 = vmatprep.subr.mxu0 0.0
  %1697 = vmatpush1.msra.mxu0 %v1692
  %1698 = vmatprep.subr.mxu0 0.0
  %1699 = vmatpush1.msra.mxu0 %v1691
  %1700 = vmatprep.subr.mxu0 0.0
  %1701 = vmatpush1.msra.mxu0 %v1690
  %1702 = vmatprep.subr.mxu0 0.0
  %1703 = vmatpush1.msra.mxu0 %v1689
  %1704 = vmatprep.subr.mxu0 0.0
  %1705 = vmatpush1.msra.mxu0 %v1688
  %1706 = vmatprep.subr.mxu0 0.0
  %1707 = vmatpush1.msra.mxu0 %v1687
  %1708 = vmatprep.subr.mxu0 0.0
  %1709 = vmatpush1.msra.mxu0 %v1686
  %1710 = vmatprep.subr.mxu0 0.0
  %1711 = vmatpush1.msra.mxu0 %v1685
  %1712 = vmatprep.subr.mxu0 0.0
  %1713 = vmatpush1.msra.mxu0 %v1684
  %1714 = vmatprep.subr.mxu0 0.0
  %1715 = vmatpush1.msra.mxu0 %v1683
  %1716 = vmatprep.subr.mxu0 0.0
  %1717 = vmatpush1.msra.mxu0 %v1682
  %1718 = vmatprep.subr.mxu0 0.0
  %1719 = vmatpush1.msra.mxu0 %v1681
  %1720 = vmatprep.subr.mxu0 0.0
  %1721 = vmatpush1.msra.mxu0 %v1680
  %1722 = vmatprep.subr.mxu0 0.0
  %1723 = vmatpush1.msra.mxu0 %v1679
  %1724 = vmatprep.subr.mxu0 0.0
  %1725 = vmatpush1.msra.mxu0 %v1678
  %1726 = vmatprep.subr.mxu0 0.0
  %1727 = vmatpush2.msra.mxu0 0.0
  %1728 = vmatprep.subr.mxu0 0.0
  %1729 = vmatpush2.msra.mxu0 0.0
  %1730 = vmatprep.subr.mxu0 0.0
  %1731 = vmatpush2.msra.mxu0 0.0
  %1732 = vmatprep.subr.mxu0 0.0
  %1733 = vmatpush2.msra.mxu0 0.0
  %1734 = vmatprep.subr.mxu0 0.0
  %1735 = vmatpush2.msra.mxu0 0.0
  %1736 = vmatprep.subr.mxu0 0.0
  %1737 = vmatpush2.msra.mxu0 0.0
  %1738 = vmatprep.subr.mxu0 0.0
  %1739 = vmatpush2.msra.mxu0 0.0
  %1740 = vmatprep.subr.mxu0 0.0
  %1741 = vmatpush2.msra.mxu0 0.0
  %1742 = vmatprep.subr.mxu0 0.0
  %1743 = vmatpush2.msra.mxu0 0.0
  %1744 = vmatprep.subr.mxu0 0.0
  %1745 = vmatpush2.msra.mxu0 0.0
  %1746 = vmatprep.subr.mxu0 0.0
  %1747 = vmatpush2.msra.mxu0 0.0
  %1748 = vmatprep.subr.mxu0 0.0
  %1749 = vmatpush2.msra.mxu0 0.0
  %1750 = vmatprep.subr.mxu0 0.0
  %1751 = vmatpush2.msra.mxu0 0.0
  %1752 = vmatprep.subr.mxu0 0.0
  %1753 = vmatpush2.msra.mxu0 0.0
  %1754 = vmatprep.subr.mxu0 0.0
  %1755 = vmatpush2.msra.mxu0 0.0
  %1756 = vmatprep.subr.mxu0 0.0
  %1757 = vmatpush2.msra.mxu0 0.0
  %1758 = vmatprep.mubr.f32.mxu0 0.0
  %1759 = vmatmul.mubr.f32.gmra.mxu0 %v1674
  %v1760 = vpop.f32.mrf.mxu0
  %v1761 = vadd.f32 0.0, %v1760
  %v1762 = vpop.f32.mrf.mxu0
  %1763 = vmatprep.mubr.f32.mxu0 0.0
  %1764 = vmatmul.mubr.f32.gmra.mxu0 %v1675
  %v1765 = vpop.f32.mrf.mxu0
  %v1766 = vadd.f32 0.0, %v1765
  %v1767 = vpop.f32.mrf.mxu0
  %1768 = vmatprep.mubr.f32.mxu0 0.0
  %1769 = vmatmul.mubr.f32.gmra.mxu0 %v1676
  %v1770 = vpop.f32.mrf.mxu0
  %v1771 = vadd.f32 0.0, %v1770
  %v1772 = vpop.f32.mrf.mxu0
  %1773 = vmatprep.mubr.f32.mxu0 0.0
  %1774 = vmatmul.mubr.f32.gmra.mxu0 %v1677
  %v1775 = vpop.f32.mrf.mxu0
  %v1776 = vadd.f32 0.0, %v1775
  %v1777 = vpop.f32.mrf.mxu0
  %1778 = vdwg.mxu0
  %s1779 = scalar_lea.vmem %s6, 128
  %v1780 = vld [vmem:[%s1779] sm:$0xff]
  %v1781 = vld [vmem:[%s1779 + $0x8] sm:$0xff]
  %v1782 = vld [vmem:[%s1779 + $0x10] sm:$0xff]
  %v1783 = vld [vmem:[%s1779 + $0x18] sm:$0xff]
  %v1784 = vld [vmem:[%s1779 + $0x20] sm:$0xff]
  %v1785 = vld [vmem:[%s1779 + $0x28] sm:$0xff]
  %v1786 = vld [vmem:[%s1779 + $0x30] sm:$0xff]
  %v1787 = vld [vmem:[%s1779 + $0x38] sm:$0xff]
  %v1788 = vld [vmem:[%s1779 + $0x40] sm:$0xff]
  %v1789 = vld [vmem:[%s1779 + $0x48] sm:$0xff]
  %v1790 = vld [vmem:[%s1779 + $0x50] sm:$0xff]
  %v1791 = vld [vmem:[%s1779 + $0x58] sm:$0xff]
  %v1792 = vld [vmem:[%s1779 + $0x60] sm:$0xff]
  %v1793 = vld [vmem:[%s1779 + $0x68] sm:$0xff]
  %v1794 = vld [vmem:[%s1779 + $0x70] sm:$0xff]
  %v1795 = vld [vmem:[%s1779 + $0x78] sm:$0xff]
  %1796 = vmatprep.subr.mxu0 0.0
  %1797 = vmatpush1.msra.mxu0 %v1795
  %1798 = vmatprep.subr.mxu0 0.0
  %1799 = vmatpush1.msra.mxu0 %v1794
  %1800 = vmatprep.subr.mxu0 0.0
  %1801 = vmatpush1.msra.mxu0 %v1793
  %1802 = vmatprep.subr.mxu0 0.0
  %1803 = vmatpush1.msra.mxu0 %v1792
  %1804 = vmatprep.subr.mxu0 0.0
  %1805 = vmatpush1.msra.mxu0 %v1791
  %1806 = vmatprep.subr.mxu0 0.0
  %1807 = vmatpush1.msra.mxu0 %v1790
  %1808 = vmatprep.subr.mxu0 0.0
  %1809 = vmatpush1.msra.mxu0 %v1789
  %1810 = vmatprep.subr.mxu0 0.0
  %1811 = vmatpush1.msra.mxu0 %v1788
  %1812 = vmatprep.subr.mxu0 0.0
  %1813 = vmatpush1.msra.mxu0 %v1787
  %1814 = vmatprep.subr.mxu0 0.0
  %1815 = vmatpush1.msra.mxu0 %v1786
  %1816 = vmatprep.subr.mxu0 0.0
  %1817 = vmatpush1.msra.mxu0 %v1785
  %1818 = vmatprep.subr.mxu0 0.0
  %1819 = vmatpush1.msra.mxu0 %v1784
  %1820 = vmatprep.subr.mxu0 0.0
  %1821 = vmatpush1.msra.mxu0 %v1783
  %1822 = vmatprep.subr.mxu0 0.0
  %1823 = vmatpush1.msra.mxu0 %v1782
  %1824 = vmatprep.subr.mxu0 0.0
  %1825 = vmatpush1.msra.mxu0 %v1781
  %1826 = vmatprep.subr.mxu0 0.0
  %1827 = vmatpush1.msra.mxu0 %v1780
  %1828 = vmatprep.subr.mxu0 0.0
  %1829 = vmatpush2.msra.mxu0 0.0
  %1830 = vmatprep.subr.mxu0 0.0
  %1831 = vmatpush2.msra.mxu0 0.0
  %1832 = vmatprep.subr.mxu0 0.0
  %1833 = vmatpush2.msra.mxu0 0.0
  %1834 = vmatprep.subr.mxu0 0.0
  %1835 = vmatpush2.msra.mxu0 0.0
  %1836 = vmatprep.subr.mxu0 0.0
  %1837 = vmatpush2.msra.mxu0 0.0
  %1838 = vmatprep.subr.mxu0 0.0
  %1839 = vmatpush2.msra.mxu0 0.0
  %1840 = vmatprep.subr.mxu0 0.0
  %1841 = vmatpush2.msra.mxu0 0.0
  %1842 = vmatprep.subr.mxu0 0.0
  %1843 = vmatpush2.msra.mxu0 0.0
  %1844 = vmatprep.subr.mxu0 0.0
  %1845 = vmatpush2.msra.mxu0 0.0
  %1846 = vmatprep.subr.mxu0 0.0
  %1847 = vmatpush2.msra.mxu0 0.0
  %1848 = vmatprep.subr.mxu0 0.0
  %1849 = vmatpush2.msra.mxu0 0.0
  %1850 = vmatprep.subr.mxu0 0.0
  %1851 = vmatpush2.msra.mxu0 0.0
  %1852 = vmatprep.subr.mxu0 0.0
  %1853 = vmatpush2.msra.mxu0 0.0
  %1854 = vmatprep.subr.mxu0 0.0
  %1855 = vmatpush2.msra.mxu0 0.0
  %1856 = vmatprep.subr.mxu0 0.0
  %1857 = vmatpush2.msra.mxu0 0.0
  %1858 = vmatprep.subr.mxu0 0.0
  %1859 = vmatpush2.msra.mxu0 0.0
  %1860 = vmatprep.mubr.f32.mxu0 0.0
  %1861 = vmatmul.mubr.f32.gmra.mxu0 %v1674
  %v1862 = vpop.f32.mrf.mxu0
  %v1863 = vadd.f32 0.0, %v1862
  %v1864 = vpop.f32.mrf.mxu0
  %1865 = vmatprep.mubr.f32.mxu0 0.0
  %1866 = vmatmul.mubr.f32.gmra.mxu0 %v1675
  %v1867 = vpop.f32.mrf.mxu0
  %v1868 = vadd.f32 0.0, %v1867
  %v1869 = vpop.f32.mrf.mxu0
  %1870 = vmatprep.mubr.f32.mxu0 0.0
  %1871 = vmatmul.mubr.f32.gmra.mxu0 %v1676
  %v1872 = vpop.f32.mrf.mxu0
  %v1873 = vadd.f32 0.0, %v1872
  %v1874 = vpop.f32.mrf.mxu0
  %1875 = vmatprep.mubr.f32.mxu0 0.0
  %1876 = vmatmul.mubr.f32.gmra.mxu0 %v1677
  %v1877 = vpop.f32.mrf.mxu0
  %v1878 = vadd.f32 0.0, %v1877
  %v1879 = vpop.f32.mrf.mxu0
  %1880 = vdwg.mxu0
  %v1881 = vmax.f32 %v1761, %v1863
  %v1882 = vmax.f32 %v1766, %v1868
  %v1883 = vmax.f32 %v1771, %v1873
  %v1884 = vmax.f32 %v1776, %v1878
  %v1885 = vld [vmem:[%s7] sm:$0xff]
  %v1886 = vld [vmem:[%s7 + $0x8] sm:$0xff]
  %v1887 = vld [vmem:[%s7 + $0x10] sm:$0xff]
  %v1888 = vld [vmem:[%s7 + $0x18] sm:$0xff]
  %v1889 = vld [vmem:[%s7 + $0x20] sm:$0xff]
  %v1890 = vld [vmem:[%s7 + $0x28] sm:$0xff]
  %v1891 = vld [vmem:[%s7 + $0x30] sm:$0xff]
  %v1892 = vld [vmem:[%s7 + $0x38] sm:$0xff]
  %v1893 = vld [vmem:[%s7 + $0x40] sm:$0xff]
  %v1894 = vld [vmem:[%s7 + $0x48] sm:$0xff]
  %v1895 = vld [vmem:[%s7 + $0x50] sm:$0xff]
  %v1896 = vld [vmem:[%s7 + $0x58] sm:$0xff]
  %v1897 = vld [vmem:[%s7 + $0x60] sm:$0xff]
  %v1898 = vld [vmem:[%s7 + $0x68] sm:$0xff]
  %v1899 = vld [vmem:[%s7 + $0x70] sm:$0xff]
  %v1900 = vld [vmem:[%s7 + $0x78] sm:$0xff]
  %v1901 = vld [vmem:[%s7 + $0x80] sm:$0xff]
  %v1902 = vld [vmem:[%s7 + $0x88] sm:$0xff]
  %v1903 = vld [vmem:[%s7 + $0x90] sm:$0xff]
  %v1904 = vld [vmem:[%s7 + $0x98] sm:$0xff]
  %v1905 = vld [vmem:[%s7 + $0xa0] sm:$0xff]
  %v1906 = vld [vmem:[%s7 + $0xa8] sm:$0xff]
  %v1907 = vld [vmem:[%s7 + $0xb0] sm:$0xff]
  %v1908 = vld [vmem:[%s7 + $0xb8] sm:$0xff]
  %v1909 = vld [vmem:[%s7 + $0xc0] sm:$0xff]
  %v1910 = vld [vmem:[%s7 + $0xc8] sm:$0xff]
  %v1911 = vld [vmem:[%s7 + $0xd0] sm:$0xff]
  %v1912 = vld [vmem:[%s7 + $0xd8] sm:$0xff]
  %v1913 = vld [vmem:[%s7 + $0xe0] sm:$0xff]
  %v1914 = vld [vmem:[%s7 + $0xe8] sm:$0xff]
  %v1915 = vld [vmem:[%s7 + $0xf0] sm:$0xff]
  %v1916 = vld [vmem:[%s7 + $0xf8] sm:$0xff]
  %v1917 = vld [vmem:[%s7 + $0x100] sm:$0xff]
  %v1918 = vld [vmem:[%s7 + $0x108] sm:$0xff]
  %v1919 = vld [vmem:[%s7 + $0x110] sm:$0xff]
  %v1920 = vld [vmem:[%s7 + $0x118] sm:$0xff]
  %v1921 = vld [vmem:[%s7 + $0x120] sm:$0xff]
  %v1922 = vld [vmem:[%s7 + $0x128] sm:$0xff]
  %v1923 = vld [vmem:[%s7 + $0x130] sm:$0xff]
  %v1924 = vld [vmem:[%s7 + $0x138] sm:$0xff]
  %v1925 = vld [vmem:[%s7 + $0x140] sm:$0xff]
  %v1926 = vld [vmem:[%s7 + $0x148] sm:$0xff]
  %v1927 = vld [vmem:[%s7 + $0x150] sm:$0xff]
  %v1928 = vld [vmem:[%s7 + $0x158] sm:$0xff]
  %v1929 = vld [vmem:[%s7 + $0x160] sm:$0xff]
  %v1930 = vld [vmem:[%s7 + $0x168] sm:$0xff]
  %v1931 = vld [vmem:[%s7 + $0x170] sm:$0xff]
  %v1932 = vld [vmem:[%s7 + $0x178] sm:$0xff]
  %v1933 = vld [vmem:[%s7 + $0x180] sm:$0xff]
  %v1934 = vld [vmem:[%s7 + $0x188] sm:$0xff]
  %v1935 = vld [vmem:[%s7 + $0x190] sm:$0xff]
  %v1936 = vld [vmem:[%s7 + $0x198] sm:$0xff]
  %v1937 = vld [vmem:[%s7 + $0x1a0] sm:$0xff]
  %v1938 = vld [vmem:[%s7 + $0x1a8] sm:$0xff]
  %v1939 = vld [vmem:[%s7 + $0x1b0] sm:$0xff]
  %v1940 = vld [vmem:[%s7 + $0x1b8] sm:$0xff]
  %v1941 = vld [vmem:[%s7 + $0x1c0] sm:$0xff]
  %v1942 = vld [vmem:[%s7 + $0x1c8] sm:$0xff]
  %v1943 = vld [vmem:[%s7 + $0x1d0] sm:$0xff]
  %v1944 = vld [vmem:[%s7 + $0x1d8] sm:$0xff]
  %v1945 = vld [vmem:[%s7 + $0x1e0] sm:$0xff]
  %v1946 = vld [vmem:[%s7 + $0x1e8] sm:$0xff]
  %v1947 = vld [vmem:[%s7 + $0x1f0] sm:$0xff]
  %v1948 = vld [vmem:[%s7 + $0x1f8] sm:$0xff]
  %v1949 = vld [vmem:[%s8] sm:$0x1]
  %v1951 = vlaneseq
  %v1952 = vshrl.u32 %v1951, 7
  %v1953 = vsub.s32 0, %v1952
  %v1954 = vrot.slane %v1949, %v1953
  %1956 = vmatprep.subr.mxu0 0.0
  %1957 = vmatpush1.msra.mxu0 %v1900
  %1958 = vmatprep.subr.mxu0 0.0
  %1959 = vmatpush1.msra.mxu0 %v1899
  %1960 = vmatprep.subr.mxu0 0.0
  %1961 = vmatpush1.msra.mxu0 %v1898
  %1962 = vmatprep.subr.mxu0 0.0
  %1963 = vmatpush1.msra.mxu0 %v1897
  %1964 = vmatprep.subr.mxu0 0.0
  %1965 = vmatpush1.msra.mxu0 %v1896
  %1966 = vmatprep.subr.mxu0 0.0
  %1967 = vmatpush1.msra.mxu0 %v1895
  %1968 = vmatprep.subr.mxu0 0.0
  %1969 = vmatpush1.msra.mxu0 %v1894
  %1970 = vmatprep.subr.mxu0 0.0
  %1971 = vmatpush1.msra.mxu0 %v1893
  %1972 = vmatprep.subr.mxu0 0.0
  %1973 = vmatpush1.msra.mxu0 %v1892
  %1974 = vmatprep.subr.mxu0 0.0
  %1975 = vmatpush1.msra.mxu0 %v1891
  %1976 = vmatprep.subr.mxu0 0.0
  %1977 = vmatpush1.msra.mxu0 %v1890
  %1978 = vmatprep.subr.mxu0 0.0
  %1979 = vmatpush1.msra.mxu0 %v1889
  %1980 = vmatprep.subr.mxu0 0.0
  %1981 = vmatpush1.msra.mxu0 %v1888
  %1982 = vmatprep.subr.mxu0 0.0
  %1983 = vmatpush1.msra.mxu0 %v1887
  %1984 = vmatprep.subr.mxu0 0.0
  %1985 = vmatpush1.msra.mxu0 %v1886
  %1986 = vmatprep.subr.mxu0 0.0
  %1987 = vmatpush1.msra.mxu0 %v1885
  %1988 = vmatprep.subr.mxu0 0.0
  %1989 = vmatpush2.msra.mxu0 %v1916
  %1990 = vmatprep.subr.mxu0 0.0
  %1991 = vmatpush2.msra.mxu0 %v1915
  %1992 = vmatprep.subr.mxu0 0.0
  %1993 = vmatpush2.msra.mxu0 %v1914
  %1994 = vmatprep.subr.mxu0 0.0
  %1995 = vmatpush2.msra.mxu0 %v1913
  %1996 = vmatprep.subr.mxu0 0.0
  %1997 = vmatpush2.msra.mxu0 %v1912
  %1998 = vmatprep.subr.mxu0 0.0
  %1999 = vmatpush2.msra.mxu0 %v1911
  %2000 = vmatprep.subr.mxu0 0.0
  %2001 = vmatpush2.msra.mxu0 %v1910
  %2002 = vmatprep.subr.mxu0 0.0
  %2003 = vmatpush2.msra.mxu0 %v1909
  %2004 = vmatprep.subr.mxu0 0.0
  %2005 = vmatpush2.msra.mxu0 %v1908
  %2006 = vmatprep.subr.mxu0 0.0
  %2007 = vmatpush2.msra.mxu0 %v1907
  %2008 = vmatprep.subr.mxu0 0.0
  %2009 = vmatpush2.msra.mxu0 %v1906
  %2010 = vmatprep.subr.mxu0 0.0
  %2011 = vmatpush2.msra.mxu0 %v1905
  %2012 = vmatprep.subr.mxu0 0.0
  %2013 = vmatpush2.msra.mxu0 %v1904
  %2014 = vmatprep.subr.mxu0 0.0
  %2015 = vmatpush2.msra.mxu0 %v1903
  %2016 = vmatprep.subr.mxu0 0.0
  %2017 = vmatpush2.msra.mxu0 %v1902
  %2018 = vmatprep.subr.mxu0 0.0
  %2019 = vmatpush2.msra.mxu0 %v1901
  %2020 = vmatprep.mubr.f32.mxu0 %v1882
  %2021 = vmatmul.mubr.f32.gmra.mxu0 %v1881
  %v2022 = vpop.f32.mrf.mxu0
  %v2023 = vadd.f32 %v1954, %v2022
  %v2024 = vpop.f32.mrf.mxu0
  %2025 = vdwg.mxu0
  %2026 = vmatprep.subr.mxu0 0.0
  %2027 = vmatpush1.msra.mxu0 %v1932
  %2028 = vmatprep.subr.mxu0 0.0
  %2029 = vmatpush1.msra.mxu0 %v1931
  %2030 = vmatprep.subr.mxu0 0.0
  %2031 = vmatpush1.msra.mxu0 %v1930
  %2032 = vmatprep.subr.mxu0 0.0
  %2033 = vmatpush1.msra.mxu0 %v1929
  %2034 = vmatprep.subr.mxu0 0.0
  %2035 = vmatpush1.msra.mxu0 %v1928
  %2036 = vmatprep.subr.mxu0 0.0
  %2037 = vmatpush1.msra.mxu0 %v1927
  %2038 = vmatprep.subr.mxu0 0.0
  %2039 = vmatpush1.msra.mxu0 %v1926
  %2040 = vmatprep.subr.mxu0 0.0
  %2041 = vmatpush1.msra.mxu0 %v1925
  %2042 = vmatprep.subr.mxu0 0.0
  %2043 = vmatpush1.msra.mxu0 %v1924
  %2044 = vmatprep.subr.mxu0 0.0
  %2045 = vmatpush1.msra.mxu0 %v1923
  %2046 = vmatprep.subr.mxu0 0.0
  %2047 = vmatpush1.msra.mxu0 %v1922
  %2048 = vmatprep.subr.mxu0 0.0
  %2049 = vmatpush1.msra.mxu0 %v1921
  %2050 = vmatprep.subr.mxu0 0.0
  %2051 = vmatpush1.msra.mxu0 %v1920
  %2052 = vmatprep.subr.mxu0 0.0
  %2053 = vmatpush1.msra.mxu0 %v1919
  %2054 = vmatprep.subr.mxu0 0.0
  %2055 = vmatpush1.msra.mxu0 %v1918
  %2056 = vmatprep.subr.mxu0 0.0
  %2057 = vmatpush1.msra.mxu0 %v1917
  %2058 = vmatprep.subr.mxu0 0.0
  %2059 = vmatpush2.msra.mxu0 %v1948
  %2060 = vmatprep.subr.mxu0 0.0
  %2061 = vmatpush2.msra.mxu0 %v1947
  %2062 = vmatprep.subr.mxu0 0.0
  %2063 = vmatpush2.msra.mxu0 %v1946
  %2064 = vmatprep.subr.mxu0 0.0
  %2065 = vmatpush2.msra.mxu0 %v1945
  %2066 = vmatprep.subr.mxu0 0.0
  %2067 = vmatpush2.msra.mxu0 %v1944
  %2068 = vmatprep.subr.mxu0 0.0
  %2069 = vmatpush2.msra.mxu0 %v1943
  %2070 = vmatprep.subr.mxu0 0.0
  %2071 = vmatpush2.msra.mxu0 %v1942
  %2072 = vmatprep.subr.mxu0 0.0
  %2073 = vmatpush2.msra.mxu0 %v1941
  %2074 = vmatprep.subr.mxu0 0.0
  %2075 = vmatpush2.msra.mxu0 %v1940
  %2076 = vmatprep.subr.mxu0 0.0
  %2077 = vmatpush2.msra.mxu0 %v1939
  %2078 = vmatprep.subr.mxu0 0.0
  %2079 = vmatpush2.msra.mxu0 %v1938
  %2080 = vmatprep.subr.mxu0 0.0
  %2081 = vmatpush2.msra.mxu0 %v1937
  %2082 = vmatprep.subr.mxu0 0.0
  %2083 = vmatpush2.msra.mxu0 %v1936
  %2084 = vmatprep.subr.mxu0 0.0
  %2085 = vmatpush2.msra.mxu0 %v1935
  %2086 = vmatprep.subr.mxu0 0.0
  %2087 = vmatpush2.msra.mxu0 %v1934
  %2088 = vmatprep.subr.mxu0 0.0
  %2089 = vmatpush2.msra.mxu0 %v1933
  %2090 = vmatprep.mubr.f32.mxu0 %v1884
  %2091 = vmatmul.mubr.f32.gmra.mxu0 %v1883
  %v2092 = vpop.f32.mrf.mxu0
  %v2093 = vadd.f32 %v2023, %v2092
  %v2094 = vpop.f32.mrf.mxu0
  %2095 = vdwg.mxu0
  %v2096 = vmax.f32 %v2093, 0.0
  %v2097 = vld [vmem:[%s9] sm:$0xff]
  %v2098 = vld [vmem:[%s9 + $0x8] sm:$0xff]
  %v2099 = vld [vmem:[%s9 + $0x10] sm:$0xff]
  %v2100 = vld [vmem:[%s9 + $0x18] sm:$0xff]
  %v2101 = vld [vmem:[%s9 + $0x20] sm:$0xff]
  %v2102 = vld [vmem:[%s9 + $0x28] sm:$0xff]
  %v2103 = vld [vmem:[%s9 + $0x30] sm:$0xff]
  %v2104 = vld [vmem:[%s9 + $0x38] sm:$0xff]
  %v2105 = vld [vmem:[%s9 + $0x40] sm:$0xff]
  %v2106 = vld [vmem:[%s9 + $0x48] sm:$0xff]
  %v2107 = vld [vmem:[%s9 + $0x50] sm:$0xff]
  %v2108 = vld [vmem:[%s9 + $0x58] sm:$0xff]
  %v2109 = vld [vmem:[%s9 + $0x60] sm:$0xff]
  %v2110 = vld [vmem:[%s9 + $0x68] sm:$0xff]
  %v2111 = vld [vmem:[%s9 + $0x70] sm:$0xff]
  %v2112 = vld [vmem:[%s9 + $0x78] sm:$0xff]
  %v2113 = vld [vmem:[%s10] sm:$0x1]
  %v2115 = vlaneseq
  %v2116 = vshrl.u32 %v2115, 7
  %v2117 = vsub.s32 0, %v2116
  %v2118 = vrot.slane %v2113, %v2117
  %2120 = vmatprep.subr.mxu0 0.0
  %2121 = vmatpush1.msra.mxu0 %v2112
  %2122 = vmatprep.subr.mxu0 0.0
  %2123 = vmatpush1.msra.mxu0 %v2111
  %2124 = vmatprep.subr.mxu0 0.0
  %2125 = vmatpush1.msra.mxu0 %v2110
  %2126 = vmatprep.subr.mxu0 0.0
  %2127 = vmatpush1.msra.mxu0 %v2109
  %2128 = vmatprep.subr.mxu0 0.0
  %2129 = vmatpush1.msra.mxu0 %v2108
  %2130 = vmatprep.subr.mxu0 0.0
  %2131 = vmatpush1.msra.mxu0 %v2107
  %2132 = vmatprep.subr.mxu0 0.0
  %2133 = vmatpush1.msra.mxu0 %v2106
  %2134 = vmatprep.subr.mxu0 0.0
  %2135 = vmatpush1.msra.mxu0 %v2105
  %2136 = vmatprep.subr.mxu0 0.0
  %2137 = vmatpush1.msra.mxu0 %v2104
  %2138 = vmatprep.subr.mxu0 0.0
  %2139 = vmatpush1.msra.mxu0 %v2103
  %2140 = vmatprep.subr.mxu0 0.0
  %2141 = vmatpush1.msra.mxu0 %v2102
  %2142 = vmatprep.subr.mxu0 0.0
  %2143 = vmatpush1.msra.mxu0 %v2101
  %2144 = vmatprep.subr.mxu0 0.0
  %2145 = vmatpush1.msra.mxu0 %v2100
  %2146 = vmatprep.subr.mxu0 0.0
  %2147 = vmatpush1.msra.mxu0 %v2099
  %2148 = vmatprep.subr.mxu0 0.0
  %2149 = vmatpush1.msra.mxu0 %v2098
  %2150 = vmatprep.subr.mxu0 0.0
  %2151 = vmatpush1.msra.mxu0 %v2097
  %2152 = vmatprep.subr.mxu0 0.0
  %2153 = vmatpush2.msra.mxu0 0.0
  %2154 = vmatprep.subr.mxu0 0.0
  %2155 = vmatpush2.msra.mxu0 0.0
  %2156 = vmatprep.subr.mxu0 0.0
  %2157 = vmatpush2.msra.mxu0 0.0
  %2158 = vmatprep.subr.mxu0 0.0
  %2159 = vmatpush2.msra.mxu0 0.0
  %2160 = vmatprep.subr.mxu0 0.0
  %2161 = vmatpush2.msra.mxu0 0.0
  %2162 = vmatprep.subr.mxu0 0.0
  %2163 = vmatpush2.msra.mxu0 0.0
  %2164 = vmatprep.subr.mxu0 0.0
  %2165 = vmatpush2.msra.mxu0 0.0
  %2166 = vmatprep.subr.mxu0 0.0
  %2167 = vmatpush2.msra.mxu0 0.0
  %2168 = vmatprep.subr.mxu0 0.0
  %2169 = vmatpush2.msra.mxu0 0.0
  %2170 = vmatprep.subr.mxu0 0.0
  %2171 = vmatpush2.msra.mxu0 0.0
  %2172 = vmatprep.subr.mxu0 0.0
  %2173 = vmatpush2.msra.mxu0 0.0
  %2174 = vmatprep.subr.mxu0 0.0
  %2175 = vmatpush2.msra.mxu0 0.0
  %2176 = vmatprep.subr.mxu0 0.0
  %2177 = vmatpush2.msra.mxu0 0.0
  %2178 = vmatprep.subr.mxu0 0.0
  %2179 = vmatpush2.msra.mxu0 0.0
  %2180 = vmatprep.subr.mxu0 0.0
  %2181 = vmatpush2.msra.mxu0 0.0
  %2182 = vmatprep.subr.mxu0 0.0
  %2183 = vmatpush2.msra.mxu0 0.0
  %2184 = vmatprep.mubr.f32.mxu0 0.0
  %2185 = vmatmul.mubr.f32.gmra.mxu0 %v2096
  %v2186 = vpop.f32.mrf.mxu0
  %v2187 = vadd.f32 %v2118, %v2186
  %v2188 = vpop.f32.mrf.mxu0
  %2189 = vdwg.mxu0
  %2190 = vst [vmem:[%s11] sm:$0xff] %v2187
  // Predicated region
  $region46: #{network_forward.1} parent=0 // pred_check
    _
  $region47: #{network_forward.1} parent=0 // pred_check_branch
    %2192 = sbr.rel (0) target = $region49
  $region48: #{network_forward.1} parent=0 // pred_region
    _
  $region49: #{network_forward.1} parent=0 // pred_fallthru
    _
  // Predicated region
  $region50: #{network_forward.1} parent=0 // pred_check
    _
  $region51: #{network_forward.1} parent=0 // pred_check_branch
    %2194 = sbr.rel (0) target = $region53
  $region52: #{network_forward.1} parent=0 // pred_region
    _
  $region53: #{network_forward.1} parent=0 // pred_fallthru
    _

</llo_original>
